<compile_context>
chip_gen: v5e
topology: v5e:2x2
jax: 0.10.0
libtpu: 0.0.40
codegen_flags: <defaults>
</compile_context>

<pallas_src>
import math

import jax
import jax.numpy as jnp
import numpy as np
from jax import lax
from jax.experimental import pallas as pl
from jax.experimental.pallas import tpu as pltpu

# ---------------- model config (small, PhiConfig-consistent) -------------------
B = 2                    # independent sequences
T = 16                   # tokens per sequence
H = 32                   # hidden_size
NH = 4                   # num_attention_heads
HD = H // NH             # head_size = 8
PARTIAL_ROTARY = 0.5
RD = int(PARTIAL_ROTARY * HD)   # rotary_dim = 4 (even)
RH = RD // 2                    # half rotary dim = 2
N_INNER = 4 * H                 # n_inner = 4 * hidden_size = 128
EPS = 1e-5
ROPE_THETA = 10000.0
SCALE = HD ** (-0.5)
NEG_INF = -1e30

BT = B * T                      # flattened row count = 32
OUT_LANES = 128                 # lane-dense output width
N_GROUPS = OUT_LANES // H       # 4 row-groups packed side by side
ROWS_OUT = BT // N_GROUPS       # 8 rows in the packed output slab
assert N_GROUPS * H == OUT_LANES and BT % N_GROUPS == 0 and ROWS_OUT % 8 == 0


def _gelu_new(x):
    # HF "gelu_new": 0.5*x*(1+tanh(sqrt(2/pi)*(x+0.044715*x^3)))
    c = math.sqrt(2.0 / math.pi)
    return 0.5 * x * (1.0 + jnp.tanh(c * (x + 0.044715 * x * x * x)))


# ---------------- host-side constant / weight prep (outside the kernel) --------
def _rotate_half_matrix():
    """(3H,3H) constant R3: (qkv @ R3) yields the signed rotate-half lanes for the
    Q and K sections; V section and rotary pass-through dims map to 0."""
    r = np.zeros((H, H), np.float32)
    for hi in range(NH):
        base = hi * HD
        for j in range(RH):
            r[base + RH + j, base + j] = -1.0     # first rotary half gets -x[second half]
            r[base + j, base + RH + j] = +1.0     # second rotary half gets +x[first half]
    r3 = np.zeros((3 * H, 3 * H), np.float32)
    r3[:H, :H] = r
    r3[H:2 * H, H:2 * H] = r                      # V block stays zero
    return r3


_R3 = _rotate_half_matrix()                        # numpy constant, folded into weights


def _fold_qkv_weights(wqkv, bqkv):
    """Fold SCALE into the Q columns and R3 into the weight itself:
    returns W_cat (H, 6H) and b_cat (1, 6H) so that h @ W_cat + b_cat =
    [qkv_scaled | rotate_half(qkv_scaled)]."""
    scale_vec = jnp.concatenate(
        [jnp.full((H,), SCALE, jnp.float32), jnp.ones((2 * H,), jnp.float32)])
    wq = wqkv * scale_vec[None, :]
    bq = bqkv * scale_vec[None, :]
    r3 = jnp.asarray(_R3)
    w_cat = jnp.concatenate([wq, wq @ r3], axis=-1)          # (H, 6H)
    b_cat = jnp.concatenate([bq, bq @ r3], axis=-1)          # (1, 6H)
    return w_cat, b_cat


def _rope_tables(positions):
    """Full-width cos/sin over the fused (q|k|v) lane axis: (T, 3H) each.
    Pass-through head dims get cos=1/sin=0; the whole V section gets cos=1/sin=0."""
    pos = positions.astype(jnp.float32)
    inv_freq = 1.0 / (ROPE_THETA ** (jnp.arange(0, RD, 2, dtype=jnp.float32) / RD))
    ang = pos[:, None] * inv_freq[None, :]                   # (T, RH)
    cos, sin = jnp.cos(ang), jnp.sin(ang)
    t = positions.shape[0]
    ones = jnp.ones((t, HD - RD), jnp.float32)
    zeros = jnp.zeros((t, HD - RD), jnp.float32)
    cos_hd = jnp.concatenate([cos, cos, ones], axis=-1)      # (T, HD)
    sin_hd = jnp.concatenate([sin, sin, zeros], axis=-1)
    cos_h = jnp.tile(cos_hd, (1, NH))                        # (T, H)
    sin_h = jnp.tile(sin_hd, (1, NH))
    cos3 = jnp.concatenate([cos_h, cos_h, jnp.ones_like(cos_h)], axis=-1)   # (T, 3H)
    sin3 = jnp.concatenate([sin_h, sin_h, jnp.zeros_like(sin_h)], axis=-1)
    return cos3, sin3


def _block_causal_bias(b, t):
    """(BT, BT) additive bias: 0 within-sequence-causal, -1e30 otherwise."""
    idx = jnp.arange(b * t)
    same_seq = (idx[:, None] // t) == (idx[None, :] // t)
    causal = (idx[None, :] % t) <= (idx[:, None] % t)
    return jnp.where(same_seq & causal, 0.0, NEG_INF).astype(jnp.float32)


# ---------------- the kernel ----------------------------------------------------
def phi_layer_kernel(
    x_ref, cos_ref, sin_ref, bias_ref,
    ln_w_ref, ln_b_ref,
    wcat_ref, bcat_ref,
    wd_ref, bd_ref,
    w1_ref, b1_ref, w2_ref, b2_ref,
    o_ref,
):
    x = x_ref[...]                                            # (BT, H) f32

    # ---- input LayerNorm (f32 statistics) ----
    mu = jnp.mean(x, axis=-1, keepdims=True)
    xc = x - mu
    var = jnp.mean(xc * xc, axis=-1, keepdims=True)
    h = xc * lax.rsqrt(var + EPS) * ln_w_ref[...] + ln_b_ref[...]
    h_b = h.astype(jnp.bfloat16)                              # bf16 MXU operands

    # ---- fused QKV + rotate-half projection (R3 and SCALE folded into weights) ----
    qkv6 = jnp.dot(h_b, wcat_ref[...], preferred_element_type=jnp.float32) + bcat_ref[...]
    # partial RoPE with full-width cos/sin masks (V and pass-through dims: cos=1,sin=0)
    qkv = qkv6[:, :3 * H] * cos_ref[...] + qkv6[:, 3 * H:] * sin_ref[...]   # (BT,3H) f32
    qkv_b = qkv.astype(jnp.bfloat16)                          # one cast for all heads

    bias = bias_ref[...]                                      # (BT, BT) block-diag causal

    # Per-head attention: one QK^T push + one PV push per head (scale pre-folded into Q).
    heads = []
    for hi in range(NH):
        qh = qkv_b[:, hi * HD:(hi + 1) * HD]
        kh = qkv_b[:, H + hi * HD:H + (hi + 1) * HD]
        vh = qkv_b[:, 2 * H + hi * HD:2 * H + (hi + 1) * HD]
        s = lax.dot_general(qh, kh, (((1,), (1,)), ((), ())),
                            preferred_element_type=jnp.float32) + bias
        s = s - jnp.max(s, axis=-1, keepdims=True)
        p = jnp.exp(s)                                        # EUP
        p = p * pl.reciprocal(jnp.sum(p, axis=-1, keepdims=True), approx=True)
        heads.append(jnp.dot(p.astype(jnp.bfloat16), vh,
                             preferred_element_type=jnp.float32))     # (BT, HD)

    # dense projection hoisted out of the head loop: one (BT,H)@(H,H) push
    attn = jnp.concatenate(heads, axis=-1)                    # (BT, H) f32
    attn_out = jnp.dot(attn.astype(jnp.bfloat16), wd_ref[...],
                       preferred_element_type=jnp.float32) + bd_ref[...]

    # ---- MLP: fc1 -> gelu_new (f32, EUP tanh) -> fc2 ----
    f = jnp.dot(h_b, w1_ref[...], preferred_element_type=jnp.float32) + b1_ref[...]
    f = _gelu_new(f)                                          # (BT, 4H): lane-dense
    mlp_out = jnp.dot(f.astype(jnp.bfloat16), w2_ref[...],
                      preferred_element_type=jnp.float32) + b2_ref[...]

    # ---- parallel residual sum ----
    out = attn_out + mlp_out + x                              # (BT, H) f32

    # ---- lane-dense packed store: (BT,H)=(32,32) -> (8,128), unmasked vst ----
    # sublane-aligned 8-row chunks placed side by side along lanes; the wrapper
    # un-permutes with a free XLA reshape/transpose.
    o_ref[...] = jnp.concatenate(
        [out[g * ROWS_OUT:(g + 1) * ROWS_OUT, :] for g in range(N_GROUPS)], axis=-1)


# ---------------- wrapper --------------------------------------------------------
@jax.jit
def phi_layer(x, positions, params):
    """x: (B, T, H) f32; positions: (T,) int32; params: f32 master weights."""
    ln_w, ln_b, wqkv, bqkv, wd, bd, w1, b1, w2, b2 = params
    b, t, _ = x.shape
    bt = b * t
    x2d = x.reshape(bt, H)                                    # flatten B into rows

    cos3, sin3 = _rope_tables(positions)                      # (T, 3H)
    cos3 = jnp.tile(cos3, (b, 1))                             # (BT, 3H)
    sin3 = jnp.tile(sin3, (b, 1))
    bias = _block_causal_bias(b, t)                           # (BT, BT)
    wcat, bcat = _fold_qkv_weights(wqkv, bqkv)                # R3 + SCALE folded
    bf = lambda w: w.astype(jnp.bfloat16)

    flops = (2 * bt * H * 6 * H                # fused qkv+rot projection
             + 4 * NH * bt * bt * HD           # qk^T + pv
             + 2 * bt * H * H                  # dense
             + 4 * bt * H * N_INNER)           # fc1 + fc2
    transcendentals = NH * bt * bt + bt * N_INNER
    bytes_accessed = (4 * bt * H + 4 * ROWS_OUT * OUT_LANES
                      + 2 * (H * 6 * H + H * H + 2 * H * N_INNER)
                      + 4 * (2 * bt * 3 * H + bt * bt + 6 * H + 4 * H + N_INNER))

    c2 = lambda i: (0, 0)                       # single grid step, whole-array blocks
    out_packed = pl.pallas_call(
        phi_layer_kernel,
        grid=(1,),
        in_specs=[
            pl.BlockSpec((bt, H), c2),          # x (flattened rows)
            pl.BlockSpec((bt, 3 * H), c2),      # cos3
            pl.BlockSpec((bt, 3 * H), c2),      # sin3
            pl.BlockSpec((bt, bt), c2),         # block-diagonal causal bias
            pl.BlockSpec((1, H), c2),           # ln_w
            pl.BlockSpec((1, H), c2),           # ln_b
            pl.BlockSpec((H, 6 * H), c2),       # fused qkv+rot weight (bf16)
            pl.BlockSpec((1, 6 * H), c2),       # fused qkv+rot bias (f32)
            pl.BlockSpec((H, H), c2),           # wd (bf16)
            pl.BlockSpec((1, H), c2),           # bd
            pl.BlockSpec((H, N_INNER), c2),     # w1 (bf16)
            pl.BlockSpec((1, N_INNER), c2),     # b1
            pl.BlockSpec((N_INNER, H), c2),     # w2 (bf16)
            pl.BlockSpec((1, H), c2),           # b2
        ],
        out_specs=pl.BlockSpec((ROWS_OUT, OUT_LANES), c2),
        out_shape=jax.ShapeDtypeStruct((ROWS_OUT, OUT_LANES), jnp.float32),
        compiler_params=pltpu.CompilerParams(dimension_semantics=("arbitrary",)),
        cost_estimate=pl.CostEstimate(flops=flops,
                                      transcendentals=transcendentals,
                                      bytes_accessed=bytes_accessed),
    )(x2d, cos3, sin3, bias, ln_w, ln_b,
      bf(wcat), bcat, bf(wd), bd, bf(w1), b1, bf(w2), b2)

    # un-permute the lane-dense slab back to (B, T, H): pure XLA layout plumbing
    return (out_packed.reshape(ROWS_OUT, N_GROUPS, H)
            .transpose(1, 0, 2).reshape(b, t, H))


# ---------------- pure-JAX f32 reference (correctness check) --------------------
def phi_layer_ref(x, positions, params):
    ln_w, ln_b, wqkv, bqkv, wd, bd, w1, b1, w2, b2 = params
    inv_freq = 1.0 / (ROPE_THETA ** (jnp.arange(0, RD, 2, dtype=jnp.float32) / RD))
    ang = positions.astype(jnp.float32)[:, None] * inv_freq[None, :]
    cos, sin = jnp.cos(ang), jnp.sin(ang)

    def one(xs):
        mu = jnp.mean(xs, -1, keepdims=True)
        var = jnp.mean((xs - mu) ** 2, -1, keepdims=True)
        h = (xs - mu) / jnp.sqrt(var + EPS) * ln_w + ln_b
        qkv = h @ wqkv + bqkv
        q, k, v = qkv[:, :H], qkv[:, H:2 * H], qkv[:, 2 * H:]

        def rope(tns):
            tns = tns.reshape(T, NH, HD)
            t1, t2, tp = tns[..., :RH], tns[..., RH:RD], tns[..., RD:]
            c, s = cos[:, None, :], sin[:, None, :]
            return jnp.concatenate([t1 * c - t2 * s, t2 * c + t1 * s, tp], -1)

        qh, kh = rope(q), rope(k)
        vh = v.reshape(T, NH, HD)
        sc = jnp.einsum("qhd,khd->hqk", qh, kh) * SCALE
        mask = jnp.tril(jnp.ones((T, T), bool))
        sc = jnp.where(mask[None], sc, NEG_INF)
        p = jax.nn.softmax(sc, -1)
        o = jnp.einsum("hqk,khd->qhd", p, vh).reshape(T, H)
        attn_out = o @ wd + bd
        f = _gelu_new(h @ w1 + b1)
        mlp_out = f @ w2 + b2
        return attn_out + mlp_out + xs

    return jax.vmap(one)(x)


if __name__ == "__main__":
    key = jax.random.PRNGKey(0)
    ks = jax.random.split(key, 12)

    def init(k, shape, scale=0.02):
        return scale * jax.random.normal(k, shape, dtype=jnp.float32)

    x = jax.random.normal(ks[0], (B, T, H), dtype=jnp.float32)
    positions = jnp.arange(T, dtype=jnp.int32)

    ln_w = 1.0 + init(ks[1], (1, H))
    ln_b = init(ks[2], (1, H))
    wqkv = init(ks[3], (H, 3 * H))
    bqkv = init(ks[4], (1, 3 * H))
    wd = init(ks[5], (H, H))
    bd = init(ks[6], (1, H))
    w1 = init(ks[7], (H, N_INNER))
    b1 = init(ks[8], (1, N_INNER))
    w2 = init(ks[9], (N_INNER, H))
    b2 = init(ks[10], (1, H))
    params = (ln_w, ln_b, wqkv, bqkv, wd, bd, w1, b1, w2, b2)

    out = jax.block_until_ready(phi_layer(x, positions, params))
    ref = phi_layer_ref(x, positions, params)

    assert out.shape == (B, T, H) and out.dtype == jnp.float32
    max_err = float(jnp.max(jnp.abs(out - ref)))
    # bf16 matmul operands (f32 accumulation) vs the f32 reference -> loose-ish tol.
    assert jnp.allclose(out, ref, atol=2e-3, rtol=2e-3), max_err

    print("KERNEL_OK")
</pallas_src>

<mosaic_0001>
module attributes {stable_mosaic.version = 11 : i64} {
  func.func @phi_layer_kernel(%arg0: i32, %arg1: memref<32x32xf32, #tpu.memory_space<vmem>>, %arg2: memref<32x96xf32, #tpu.memory_space<vmem>>, %arg3: memref<32x96xf32, #tpu.memory_space<vmem>>, %arg4: memref<32x32xf32, #tpu.memory_space<vmem>>, %arg5: memref<1x32xf32, #tpu.memory_space<vmem>>, %arg6: memref<1x32xf32, #tpu.memory_space<vmem>>, %arg7: memref<32x192xbf16, #tpu.memory_space<vmem>>, %arg8: memref<1x192xf32, #tpu.memory_space<vmem>>, %arg9: memref<32x32xbf16, #tpu.memory_space<vmem>>, %arg10: memref<1x32xf32, #tpu.memory_space<vmem>>, %arg11: memref<32x128xbf16, #tpu.memory_space<vmem>>, %arg12: memref<1x128xf32, #tpu.memory_space<vmem>>, %arg13: memref<128x32xbf16, #tpu.memory_space<vmem>>, %arg14: memref<1x32xf32, #tpu.memory_space<vmem>>, %arg15: memref<8x128xf32, #tpu.memory_space<vmem>>) attributes {dimension_semantics = [#tpu.dimension_semantics<arbitrary>], iteration_bounds = array<i64: 1>, scalar_prefetch = 0 : i64, scratch_operands = 0 : i64, tpu.core_type = #tpu.core_type<tc>, window_params = [{pipeline_mode = #tpu.pipeline_mode<synchronous>, transform_indices = @transform_0, window_bounds = array<i64: 32, 32>}, {pipeline_mode = #tpu.pipeline_mode<synchronous>, transform_indices = @transform_1, window_bounds = array<i64: 32, 96>}, {pipeline_mode = #tpu.pipeline_mode<synchronous>, transform_indices = @transform_2, window_bounds = array<i64: 32, 96>}, {pipeline_mode = #tpu.pipeline_mode<synchronous>, transform_indices = @transform_3, window_bounds = array<i64: 32, 32>}, {pipeline_mode = #tpu.pipeline_mode<synchronous>, transform_indices = @transform_4, window_bounds = array<i64: 1, 32>}, {pipeline_mode = #tpu.pipeline_mode<synchronous>, transform_indices = @transform_5, window_bounds = array<i64: 1, 32>}, {pipeline_mode = #tpu.pipeline_mode<synchronous>, transform_indices = @transform_6, window_bounds = array<i64: 32, 192>}, {pipeline_mode = #tpu.pipeline_mode<synchronous>, transform_indices = @transform_7, window_bounds = array<i64: 1, 192>}, {pipeline_mode = #tpu.pipeline_mode<synchronous>, transform_indices = @transform_8, window_bounds = array<i64: 32, 32>}, {pipeline_mode = #tpu.pipeline_mode<synchronous>, transform_indices = @transform_9, window_bounds = array<i64: 1, 32>}, {pipeline_mode = #tpu.pipeline_mode<synchronous>, transform_indices = @transform_10, window_bounds = array<i64: 32, 128>}, {pipeline_mode = #tpu.pipeline_mode<synchronous>, transform_indices = @transform_11, window_bounds = array<i64: 1, 128>}, {pipeline_mode = #tpu.pipeline_mode<synchronous>, transform_indices = @transform_12, window_bounds = array<i64: 128, 32>}, {pipeline_mode = #tpu.pipeline_mode<synchronous>, transform_indices = @transform_13, window_bounds = array<i64: 1, 32>}, {pipeline_mode = #tpu.pipeline_mode<synchronous>, transform_indices = @transform_14, window_bounds = array<i64: 8, 128>}]} {
    %c0 = arith.constant 0 : index
    %c0_0 = arith.constant 0 : index
    %0 = vector.load %arg1[%c0, %c0_0] : memref<32x32xf32, #tpu.memory_space<vmem>>, vector<32x32xf32>
    %cst = arith.constant dense<0.000000e+00> : vector<32xf32>
    %1 = vector.multi_reduction <add>, %0, %cst [1] : vector<32x32xf32> to vector<32xf32>
    %2 = vector.shape_cast %1 : vector<32xf32> to vector<32x1xf32>
    %cst_1 = arith.constant 3.200000e+01 : f32
    %3 = vector.broadcast %cst_1 : f32 to vector<32x1xf32>
    %4 = arith.divf %2, %3 : vector<32x1xf32>
    %5 = vector.broadcast %4 : vector<32x1xf32> to vector<32x32xf32>
    %6 = arith.subf %0, %5 : vector<32x32xf32>
    %7 = arith.mulf %6, %6 : vector<32x32xf32>
    %cst_2 = arith.constant dense<0.000000e+00> : vector<32xf32>
    %8 = vector.multi_reduction <add>, %7, %cst_2 [1] : vector<32x32xf32> to vector<32xf32>
    %9 = vector.shape_cast %8 : vector<32xf32> to vector<32x1xf32>
    %cst_3 = arith.constant 3.200000e+01 : f32
    %10 = vector.broadcast %cst_3 : f32 to vector<32x1xf32>
    %11 = arith.divf %9, %10 : vector<32x1xf32>
    %cst_4 = arith.constant 9.99999974E-6 : f32
    %12 = vector.broadcast %cst_4 : f32 to vector<32x1xf32>
    %13 = arith.addf %11, %12 : vector<32x1xf32>
    %14 = math.rsqrt %13 : vector<32x1xf32>
    %15 = vector.broadcast %14 : vector<32x1xf32> to vector<32x32xf32>
    %16 = arith.mulf %6, %15 : vector<32x32xf32>
    %c0_5 = arith.constant 0 : index
    %c0_6 = arith.constant 0 : index
    %17 = vector.load %arg5[%c0_5, %c0_6] : memref<1x32xf32, #tpu.memory_space<vmem>>, vector<1x32xf32>
    %18 = vector.broadcast %17 : vector<1x32xf32> to vector<32x32xf32>
    %19 = arith.mulf %16, %18 : vector<32x32xf32>
    %c0_7 = arith.constant 0 : index
    %c0_8 = arith.constant 0 : index
    %20 = vector.load %arg6[%c0_7, %c0_8] : memref<1x32xf32, #tpu.memory_space<vmem>>, vector<1x32xf32>
    %21 = vector.broadcast %20 : vector<1x32xf32> to vector<32x32xf32>
    %22 = arith.addf %19, %21 : vector<32x32xf32>
    %23 = arith.truncf %22 : vector<32x32xf32> to vector<32x32xbf16>
    %c0_9 = arith.constant 0 : index
    %c0_10 = arith.constant 0 : index
    %24 = vector.load %arg7[%c0_9, %c0_10] : memref<32x192xbf16, #tpu.memory_space<vmem>>, vector<32x192xbf16>
    %cst_11 = arith.constant dense<0.000000e+00> : vector<32x192xf32>
    %25 = tpu.matmul %23, %24, %cst_11 {dimension_numbers = #tpu.dot_dimension_numbers<[1], [0], [0], [1], [0, 0, 1, 1], [], []>} : vector<32x32xbf16>, vector<32x192xbf16>, vector<32x192xf32> -> vector<32x192xf32>
    %c0_12 = arith.constant 0 : index
    %c0_13 = arith.constant 0 : index
    %26 = vector.load %arg8[%c0_12, %c0_13] : memref<1x192xf32, #tpu.memory_space<vmem>>, vector<1x192xf32>
    %27 = vector.broadcast %26 : vector<1x192xf32> to vector<32x192xf32>
    %28 = arith.addf %25, %27 : vector<32x192xf32>
    %29 = vector.extract_strided_slice %28 {offsets = [0, 0], sizes = [32, 96], strides = [1, 1]} : vector<32x192xf32> to vector<32x96xf32>
    %c0_14 = arith.constant 0 : index
    %c0_15 = arith.constant 0 : index
    %30 = vector.load %arg2[%c0_14, %c0_15] : memref<32x96xf32, #tpu.memory_space<vmem>>, vector<32x96xf32>
    %31 = arith.mulf %29, %30 : vector<32x96xf32>
    %32 = vector.extract_strided_slice %28 {offsets = [0, 96], sizes = [32, 96], strides = [1, 1]} : vector<32x192xf32> to vector<32x96xf32>
    %c0_16 = arith.constant 0 : index
    %c0_17 = arith.constant 0 : index
    %33 = vector.load %arg3[%c0_16, %c0_17] : memref<32x96xf32, #tpu.memory_space<vmem>>, vector<32x96xf32>
    %34 = arith.mulf %32, %33 : vector<32x96xf32>
    %35 = arith.addf %31, %34 : vector<32x96xf32>
    %36 = arith.truncf %35 : vector<32x96xf32> to vector<32x96xbf16>
    %c0_18 = arith.constant 0 : index
    %c0_19 = arith.constant 0 : index
    %37 = vector.load %arg4[%c0_18, %c0_19] : memref<32x32xf32, #tpu.memory_space<vmem>>, vector<32x32xf32>
    %38 = vector.extract_strided_slice %36 {offsets = [0, 0], sizes = [32, 8], strides = [1, 1]} : vector<32x96xbf16> to vector<32x8xbf16>
    %39 = vector.extract_strided_slice %36 {offsets = [0, 32], sizes = [32, 8], strides = [1, 1]} : vector<32x96xbf16> to vector<32x8xbf16>
    %40 = vector.extract_strided_slice %36 {offsets = [0, 64], sizes = [32, 8], strides = [1, 1]} : vector<32x96xbf16> to vector<32x8xbf16>
    %cst_20 = arith.constant dense<0.000000e+00> : vector<32x32xf32>
    %41 = tpu.matmul %38, %39, %cst_20 {dimension_numbers = #tpu.dot_dimension_numbers<[1], [1], [0], [0], [0, 0, 1, 0], [], []>} : vector<32x8xbf16>, vector<32x8xbf16>, vector<32x32xf32> -> vector<32x32xf32>
    %42 = arith.addf %41, %37 : vector<32x32xf32>
    %cst_21 = arith.constant dense<0xFF800000> : vector<32xf32>
    %43 = vector.multi_reduction <maximumf>, %42, %cst_21 [1] : vector<32x32xf32> to vector<32xf32>
    %44 = vector.shape_cast %43 : vector<32xf32> to vector<32x1xf32>
    %45 = vector.broadcast %44 : vector<32x1xf32> to vector<32x32xf32>
    %46 = arith.subf %42, %45 : vector<32x32xf32>
    %47 = math.exp %46 : vector<32x32xf32>
    %cst_22 = arith.constant dense<0.000000e+00> : vector<32xf32>
    %48 = vector.multi_reduction <add>, %47, %cst_22 [1] : vector<32x32xf32> to vector<32xf32>
    %49 = vector.shape_cast %48 : vector<32xf32> to vector<32x1xf32>
    %50 = tpu.reciprocal %49 {approx = true} : vector<32x1xf32> -> vector<32x1xf32>
    %51 = vector.broadcast %50 : vector<32x1xf32> to vector<32x32xf32>
    %52 = arith.mulf %47, %51 : vector<32x32xf32>
    %53 = arith.truncf %52 : vector<32x32xf32> to vector<32x32xbf16>
    %cst_23 = arith.constant dense<0.000000e+00> : vector<32x8xf32>
    %54 = tpu.matmul %53, %40, %cst_23 {dimension_numbers = #tpu.dot_dimension_numbers<[1], [0], [0], [1], [0, 0, 1, 1], [], []>} : vector<32x32xbf16>, vector<32x8xbf16>, vector<32x8xf32> -> vector<32x8xf32>
    %55 = vector.extract_strided_slice %36 {offsets = [0, 8], sizes = [32, 8], strides = [1, 1]} : vector<32x96xbf16> to vector<32x8xbf16>
    %56 = vector.extract_strided_slice %36 {offsets = [0, 40], sizes = [32, 8], strides = [1, 1]} : vector<32x96xbf16> to vector<32x8xbf16>
    %57 = vector.extract_strided_slice %36 {offsets = [0, 72], sizes = [32, 8], strides = [1, 1]} : vector<32x96xbf16> to vector<32x8xbf16>
    %cst_24 = arith.constant dense<0.000000e+00> : vector<32x32xf32>
    %58 = tpu.matmul %55, %56, %cst_24 {dimension_numbers = #tpu.dot_dimension_numbers<[1], [1], [0], [0], [0, 0, 1, 0], [], []>} : vector<32x8xbf16>, vector<32x8xbf16>, vector<32x32xf32> -> vector<32x32xf32>
    %59 = arith.addf %58, %37 : vector<32x32xf32>
    %cst_25 = arith.constant dense<0xFF800000> : vector<32xf32>
    %60 = vector.multi_reduction <maximumf>, %59, %cst_25 [1] : vector<32x32xf32> to vector<32xf32>
    %61 = vector.shape_cast %60 : vector<32xf32> to vector<32x1xf32>
    %62 = vector.broadcast %61 : vector<32x1xf32> to vector<32x32xf32>
    %63 = arith.subf %59, %62 : vector<32x32xf32>
    %64 = math.exp %63 : vector<32x32xf32>
    %cst_26 = arith.constant dense<0.000000e+00> : vector<32xf32>
    %65 = vector.multi_reduction <add>, %64, %cst_26 [1] : vector<32x32xf32> to vector<32xf32>
    %66 = vector.shape_cast %65 : vector<32xf32> to vector<32x1xf32>
    %67 = tpu.reciprocal %66 {approx = true} : vector<32x1xf32> -> vector<32x1xf32>
    %68 = vector.broadcast %67 : vector<32x1xf32> to vector<32x32xf32>
    %69 = arith.mulf %64, %68 : vector<32x32xf32>
    %70 = arith.truncf %69 : vector<32x32xf32> to vector<32x32xbf16>
    %cst_27 = arith.constant dense<0.000000e+00> : vector<32x8xf32>
    %71 = tpu.matmul %70, %57, %cst_27 {dimension_numbers = #tpu.dot_dimension_numbers<[1], [0], [0], [1], [0, 0, 1, 1], [], []>} : vector<32x32xbf16>, vector<32x8xbf16>, vector<32x8xf32> -> vector<32x8xf32>
    %72 = vector.extract_strided_slice %36 {offsets = [0, 16], sizes = [32, 8], strides = [1, 1]} : vector<32x96xbf16> to vector<32x8xbf16>
    %73 = vector.extract_strided_slice %36 {offsets = [0, 48], sizes = [32, 8], strides = [1, 1]} : vector<32x96xbf16> to vector<32x8xbf16>
    %74 = vector.extract_strided_slice %36 {offsets = [0, 80], sizes = [32, 8], strides = [1, 1]} : vector<32x96xbf16> to vector<32x8xbf16>
    %cst_28 = arith.constant dense<0.000000e+00> : vector<32x32xf32>
    %75 = tpu.matmul %72, %73, %cst_28 {dimension_numbers = #tpu.dot_dimension_numbers<[1], [1], [0], [0], [0, 0, 1, 0], [], []>} : vector<32x8xbf16>, vector<32x8xbf16>, vector<32x32xf32> -> vector<32x32xf32>
    %76 = arith.addf %75, %37 : vector<32x32xf32>
    %cst_29 = arith.constant dense<0xFF800000> : vector<32xf32>
    %77 = vector.multi_reduction <maximumf>, %76, %cst_29 [1] : vector<32x32xf32> to vector<32xf32>
    %78 = vector.shape_cast %77 : vector<32xf32> to vector<32x1xf32>
    %79 = vector.broadcast %78 : vector<32x1xf32> to vector<32x32xf32>
    %80 = arith.subf %76, %79 : vector<32x32xf32>
    %81 = math.exp %80 : vector<32x32xf32>
    %cst_30 = arith.constant dense<0.000000e+00> : vector<32xf32>
    %82 = vector.multi_reduction <add>, %81, %cst_30 [1] : vector<32x32xf32> to vector<32xf32>
    %83 = vector.shape_cast %82 : vector<32xf32> to vector<32x1xf32>
    %84 = tpu.reciprocal %83 {approx = true} : vector<32x1xf32> -> vector<32x1xf32>
    %85 = vector.broadcast %84 : vector<32x1xf32> to vector<32x32xf32>
    %86 = arith.mulf %81, %85 : vector<32x32xf32>
    %87 = arith.truncf %86 : vector<32x32xf32> to vector<32x32xbf16>
    %cst_31 = arith.constant dense<0.000000e+00> : vector<32x8xf32>
    %88 = tpu.matmul %87, %74, %cst_31 {dimension_numbers = #tpu.dot_dimension_numbers<[1], [0], [0], [1], [0, 0, 1, 1], [], []>} : vector<32x32xbf16>, vector<32x8xbf16>, vector<32x8xf32> -> vector<32x8xf32>
    %89 = vector.extract_strided_slice %36 {offsets = [0, 24], sizes = [32, 8], strides = [1, 1]} : vector<32x96xbf16> to vector<32x8xbf16>
    %90 = vector.extract_strided_slice %36 {offsets = [0, 56], sizes = [32, 8], strides = [1, 1]} : vector<32x96xbf16> to vector<32x8xbf16>
    %91 = vector.extract_strided_slice %36 {offsets = [0, 88], sizes = [32, 8], strides = [1, 1]} : vector<32x96xbf16> to vector<32x8xbf16>
    %cst_32 = arith.constant dense<0.000000e+00> : vector<32x32xf32>
    %92 = tpu.matmul %89, %90, %cst_32 {dimension_numbers = #tpu.dot_dimension_numbers<[1], [1], [0], [0], [0, 0, 1, 0], [], []>} : vector<32x8xbf16>, vector<32x8xbf16>, vector<32x32xf32> -> vector<32x32xf32>
    %93 = arith.addf %92, %37 : vector<32x32xf32>
    %cst_33 = arith.constant dense<0xFF800000> : vector<32xf32>
    %94 = vector.multi_reduction <maximumf>, %93, %cst_33 [1] : vector<32x32xf32> to vector<32xf32>
    %95 = vector.shape_cast %94 : vector<32xf32> to vector<32x1xf32>
    %96 = vector.broadcast %95 : vector<32x1xf32> to vector<32x32xf32>
    %97 = arith.subf %93, %96 : vector<32x32xf32>
    %98 = math.exp %97 : vector<32x32xf32>
    %cst_34 = arith.constant dense<0.000000e+00> : vector<32xf32>
    %99 = vector.multi_reduction <add>, %98, %cst_34 [1] : vector<32x32xf32> to vector<32xf32>
    %100 = vector.shape_cast %99 : vector<32xf32> to vector<32x1xf32>
    %101 = tpu.reciprocal %100 {approx = true} : vector<32x1xf32> -> vector<32x1xf32>
    %102 = vector.broadcast %101 : vector<32x1xf32> to vector<32x32xf32>
    %103 = arith.mulf %98, %102 : vector<32x32xf32>
    %104 = arith.truncf %103 : vector<32x32xf32> to vector<32x32xbf16>
    %cst_35 = arith.constant dense<0.000000e+00> : vector<32x8xf32>
    %105 = tpu.matmul %104, %91, %cst_35 {dimension_numbers = #tpu.dot_dimension_numbers<[1], [0], [0], [1], [0, 0, 1, 1], [], []>} : vector<32x32xbf16>, vector<32x8xbf16>, vector<32x8xf32> -> vector<32x8xf32>
    %106 = tpu.concatenate %54, %71, %88, %105 in 1 : vector<32x8xf32>, vector<32x8xf32>, vector<32x8xf32>, vector<32x8xf32> -> vector<32x32xf32>
    %107 = arith.truncf %106 : vector<32x32xf32> to vector<32x32xbf16>
    %c0_36 = arith.constant 0 : index
    %c0_37 = arith.constant 0 : index
    %108 = vector.load %arg9[%c0_36, %c0_37] : memref<32x32xbf16, #tpu.memory_space<vmem>>, vector<32x32xbf16>
    %cst_38 = arith.constant dense<0.000000e+00> : vector<32x32xf32>
    %109 = tpu.matmul %107, %108, %cst_38 {dimension_numbers = #tpu.dot_dimension_numbers<[1], [0], [0], [1], [0, 0, 1, 1], [], []>} : vector<32x32xbf16>, vector<32x32xbf16>, vector<32x32xf32> -> vector<32x32xf32>
    %c0_39 = arith.constant 0 : index
    %c0_40 = arith.constant 0 : index
    %110 = vector.load %arg10[%c0_39, %c0_40] : memref<1x32xf32, #tpu.memory_space<vmem>>, vector<1x32xf32>
    %111 = vector.broadcast %110 : vector<1x32xf32> to vector<32x32xf32>
    %112 = arith.addf %109, %111 : vector<32x32xf32>
    %c0_41 = arith.constant 0 : index
    %c0_42 = arith.constant 0 : index
    %113 = vector.load %arg11[%c0_41, %c0_42] : memref<32x128xbf16, #tpu.memory_space<vmem>>, vector<32x128xbf16>
    %cst_43 = arith.constant dense<0.000000e+00> : vector<32x128xf32>
    %114 = tpu.matmul %23, %113, %cst_43 {dimension_numbers = #tpu.dot_dimension_numbers<[1], [0], [0], [1], [0, 0, 1, 1], [], []>} : vector<32x32xbf16>, vector<32x128xbf16>, vector<32x128xf32> -> vector<32x128xf32>
    %c0_44 = arith.constant 0 : index
    %c0_45 = arith.constant 0 : index
    %115 = vector.load %arg12[%c0_44, %c0_45] : memref<1x128xf32, #tpu.memory_space<vmem>>, vector<1x128xf32>
    %116 = vector.broadcast %115 : vector<1x128xf32> to vector<32x128xf32>
    %117 = arith.addf %114, %116 : vector<32x128xf32>
    %cst_46 = arith.constant 5.000000e-01 : f32
    %118 = vector.broadcast %cst_46 : f32 to vector<32x128xf32>
    %119 = arith.mulf %118, %117 : vector<32x128xf32>
    %cst_47 = arith.constant 4.471500e-02 : f32
    %120 = vector.broadcast %cst_47 : f32 to vector<32x128xf32>
    %121 = arith.mulf %120, %117 : vector<32x128xf32>
    %122 = arith.mulf %121, %117 : vector<32x128xf32>
    %123 = arith.mulf %122, %117 : vector<32x128xf32>
    %124 = arith.addf %117, %123 : vector<32x128xf32>
    %cst_48 = arith.constant 0.797884583 : f32
    %125 = vector.broadcast %cst_48 : f32 to vector<32x128xf32>
    %126 = arith.mulf %125, %124 : vector<32x128xf32>
    %127 = math.tanh %126 : vector<32x128xf32>
    %cst_49 = arith.constant 1.000000e+00 : f32
    %128 = vector.broadcast %cst_49 : f32 to vector<32x128xf32>
    %129 = arith.addf %128, %127 : vector<32x128xf32>
    %130 = arith.mulf %119, %129 : vector<32x128xf32>
    %131 = arith.truncf %130 : vector<32x128xf32> to vector<32x128xbf16>
    %c0_50 = arith.constant 0 : index
    %c0_51 = arith.constant 0 : index
    %132 = vector.load %arg13[%c0_50, %c0_51] : memref<128x32xbf16, #tpu.memory_space<vmem>>, vector<128x32xbf16>
    %cst_52 = arith.constant dense<0.000000e+00> : vector<32x32xf32>
    %133 = tpu.matmul %131, %132, %cst_52 {dimension_numbers = #tpu.dot_dimension_numbers<[1], [0], [0], [1], [0, 0, 1, 1], [], []>} : vector<32x128xbf16>, vector<128x32xbf16>, vector<32x32xf32> -> vector<32x32xf32>
    %c0_53 = arith.constant 0 : index
    %c0_54 = arith.constant 0 : index
    %134 = vector.load %arg14[%c0_53, %c0_54] : memref<1x32xf32, #tpu.memory_space<vmem>>, vector<1x32xf32>
    %135 = vector.broadcast %134 : vector<1x32xf32> to vector<32x32xf32>
    %136 = arith.addf %133, %135 : vector<32x32xf32>
    %137 = arith.addf %112, %136 : vector<32x32xf32>
    %138 = arith.addf %137, %0 : vector<32x32xf32>
    %139 = vector.extract_strided_slice %138 {offsets = [0, 0], sizes = [8, 32], strides = [1, 1]} : vector<32x32xf32> to vector<8x32xf32>
    %140 = vector.extract_strided_slice %138 {offsets = [8, 0], sizes = [8, 32], strides = [1, 1]} : vector<32x32xf32> to vector<8x32xf32>
    %141 = vector.extract_strided_slice %138 {offsets = [16, 0], sizes = [8, 32], strides = [1, 1]} : vector<32x32xf32> to vector<8x32xf32>
    %142 = vector.extract_strided_slice %138 {offsets = [24, 0], sizes = [8, 32], strides = [1, 1]} : vector<32x32xf32> to vector<8x32xf32>
    %143 = tpu.concatenate %139, %140, %141, %142 in 1 : vector<8x32xf32>, vector<8x32xf32>, vector<8x32xf32>, vector<8x32xf32> -> vector<8x128xf32>
    %c0_55 = arith.constant 0 : index
    %c0_56 = arith.constant 0 : index
    %144 = vector.load %arg15[%c0_55, %c0_56] : memref<8x128xf32, #tpu.memory_space<vmem>>, vector<8x128xf32>
    tpu.vector_store %arg15[%c0_55, %c0_56], %143 {strides = array<i32>} : memref<8x128xf32, #tpu.memory_space<vmem>>, vector<8x128xf32>,
    return
  }
  func.func @transform_0(%arg0: i32) -> (i32, i32) {
    %c0_i32 = arith.constant 0 : i32
    %c0_i32_0 = arith.constant 0 : i32
    %c0_i32_1 = arith.constant 0 : i32
    return %c0_i32, %c0_i32_0 : i32, i32
  }
  func.func @transform_1(%arg0: i32) -> (i32, i32) {
    %c0_i32 = arith.constant 0 : i32
    %c0_i32_0 = arith.constant 0 : i32
    %c0_i32_1 = arith.constant 0 : i32
    return %c0_i32, %c0_i32_0 : i32, i32
  }
  func.func @transform_2(%arg0: i32) -> (i32, i32) {
    %c0_i32 = arith.constant 0 : i32
    %c0_i32_0 = arith.constant 0 : i32
    %c0_i32_1 = arith.constant 0 : i32
    return %c0_i32, %c0_i32_0 : i32, i32
  }
  func.func @transform_3(%arg0: i32) -> (i32, i32) {
    %c0_i32 = arith.constant 0 : i32
    %c0_i32_0 = arith.constant 0 : i32
    %c0_i32_1 = arith.constant 0 : i32
    return %c0_i32, %c0_i32_0 : i32, i32
  }
  func.func @transform_4(%arg0: i32) -> (i32, i32) {
    %c0_i32 = arith.constant 0 : i32
    %c0_i32_0 = arith.constant 0 : i32
    %c0_i32_1 = arith.constant 0 : i32
    return %c0_i32, %c0_i32_0 : i32, i32
  }
  func.func @transform_5(%arg0: i32) -> (i32, i32) {
    %c0_i32 = arith.constant 0 : i32
    %c0_i32_0 = arith.constant 0 : i32
    %c0_i32_1 = arith.constant 0 : i32
    return %c0_i32, %c0_i32_0 : i32, i32
  }
  func.func @transform_6(%arg0: i32) -> (i32, i32) {
    %c0_i32 = arith.constant 0 : i32
    %c0_i32_0 = arith.constant 0 : i32
    %c0_i32_1 = arith.constant 0 : i32
    return %c0_i32, %c0_i32_0 : i32, i32
  }
  func.func @transform_7(%arg0: i32) -> (i32, i32) {
    %c0_i32 = arith.constant 0 : i32
    %c0_i32_0 = arith.constant 0 : i32
    %c0_i32_1 = arith.constant 0 : i32
    return %c0_i32, %c0_i32_0 : i32, i32
  }
  func.func @transform_8(%arg0: i32) -> (i32, i32) {
    %c0_i32 = arith.constant 0 : i32
    %c0_i32_0 = arith.constant 0 : i32
    %c0_i32_1 = arith.constant 0 : i32
    return %c0_i32, %c0_i32_0 : i32, i32
  }
  func.func @transform_9(%arg0: i32) -> (i32, i32) {
    %c0_i32 = arith.constant 0 : i32
    %c0_i32_0 = arith.constant 0 : i32
    %c0_i32_1 = arith.constant 0 : i32
    return %c0_i32, %c0_i32_0 : i32, i32
  }
  func.func @transform_10(%arg0: i32) -> (i32, i32) {
    %c0_i32 = arith.constant 0 : i32
    %c0_i32_0 = arith.constant 0 : i32
    %c0_i32_1 = arith.constant 0 : i32
    return %c0_i32, %c0_i32_0 : i32, i32
  }
  func.func @transform_11(%arg0: i32) -> (i32, i32) {
    %c0_i32 = arith.constant 0 : i32
    %c0_i32_0 = arith.constant 0 : i32
    %c0_i32_1 = arith.constant 0 : i32
    return %c0_i32, %c0_i32_0 : i32, i32
  }
  func.func @transform_12(%arg0: i32) -> (i32, i32) {
    %c0_i32 = arith.constant 0 : i32
    %c0_i32_0 = arith.constant 0 : i32
    %c0_i32_1 = arith.constant 0 : i32
    return %c0_i32, %c0_i32_0 : i32, i32
  }
  func.func @transform_13(%arg0: i32) -> (i32, i32) {
    %c0_i32 = arith.constant 0 : i32
    %c0_i32_0 = arith.constant 0 : i32
    %c0_i32_1 = arith.constant 0 : i32
    return %c0_i32, %c0_i32_0 : i32, i32
  }
  func.func @transform_14(%arg0: i32) -> (i32, i32) {
    %c0_i32 = arith.constant 0 : i32
    %c0_i32_0 = arith.constant 0 : i32
    %c0_i32_1 = arith.constant 0 : i32
    return %c0_i32, %c0_i32_0 : i32, i32
  }
}

</mosaic_0001>

<llo_original>
// kernel: mul.25
$region0: #{mul.25}
  #allocation0 [shape = 's32[1]{0}', space=sflag, size = 0x4, scoped, tag = 'scoped memory for mul.25']
  %s0 = inlined_call_operand.vmem [shape: f32[1,96], index: 0, kind: input, shape index: {}]
  %s1 = inlined_call_operand.vmem [shape: f32[1,96], index: 1, kind: input, shape index: {}]
  %s2 = inlined_call_operand.vmem [shape: f32[1,96], index: 2, kind: output, shape index: {}]
  %v3 = vld [vmem:[%s0] sm:$0x1]
  %v4 = vld [vmem:[%s1] sm:$0x1]
  %5 = xla_tuple %v3, %v4
  %6 = xla_tuple %5
  %v7 = vmul.f32 %v3, %v4
  %8 = xla_tuple %v7
  %9 = vst [vmem:[%s2] sm:$0x1] %v7

// kernel: phi_layer.1
$region0: #{phi_layer.1}
  #allocation0 [shape = 'u32[]', space=smem, size = 0x4, offset = 0x4, fixed_abs, tag = 'smem constant byte address 0x4 - core index']
  #allocation1 [shape = 'u32[72,128]{1,0:T(1,128)}', space=vmem, size = 0x9000, scoped, tag = 'internal scratch']
  %s0 = inlined_call_operand.vmem [shape: f32[32,32], index: 0, kind: input, shape index: {}]
  %s1 = inlined_call_operand.vmem [shape: f32[32,96], index: 1, kind: input, shape index: {}]
  %s2 = inlined_call_operand.vmem [shape: f32[32,96], index: 2, kind: input, shape index: {}]
  %s3 = inlined_call_operand.vmem [shape: f32[32,32], index: 3, kind: input, shape index: {}]
  %s4 = inlined_call_operand.vmem [shape: f32[1,32], index: 4, kind: input, shape index: {}]
  %s5 = inlined_call_operand.vmem [shape: f32[1,32], index: 5, kind: input, shape index: {}]
  %s6 = inlined_call_operand.vmem [shape: bf16[32,192], index: 6, kind: input, shape index: {}]
  %s7 = inlined_call_operand.vmem [shape: f32[1,192], index: 7, kind: input, shape index: {}]
  %s8 = inlined_call_operand.vmem [shape: bf16[32,32], index: 8, kind: input, shape index: {}]
  %s9 = inlined_call_operand.vmem [shape: f32[1,32], index: 9, kind: input, shape index: {}]
  %s10 = inlined_call_operand.vmem [shape: bf16[32,128], index: 10, kind: input, shape index: {}]
  %s11 = inlined_call_operand.vmem [shape: f32[1,128], index: 11, kind: input, shape index: {}]
  %s12 = inlined_call_operand.vmem [shape: bf16[128,32], index: 12, kind: input, shape index: {}]
  %s13 = inlined_call_operand.vmem [shape: f32[1,32], index: 13, kind: input, shape index: {}]
  %s14 = inlined_call_operand.vmem [shape: f32[8,128], index: 14, kind: output, shape index: {}]
  %s15 = sld [smem:[#allocation0]]
  $region66: #{phi_layer.1} parent=0
    _
  %s17 = ssub.s32 1, %s15
  %s18 = scalar_select 0, %s17, %s15
  // Predicated region
  $region2: #{phi_layer.1} parent=0 // pred_check
    _
  $region3: #{phi_layer.1} parent=0 // pred_check_branch
    %20 = sbr.rel (0) target = $region5
  $region4: #{phi_layer.1} parent=0 // pred_region
    _
  $region5: #{phi_layer.1} parent=0 // pred_fallthru
    _
  // Predicated region
  $region6: #{phi_layer.1} parent=0 // pred_check
    _
  $region7: #{phi_layer.1} parent=0 // pred_check_branch
    %22 = sbr.rel (0) target = $region9
  $region8: #{phi_layer.1} parent=0 // pred_region
    _
  $region9: #{phi_layer.1} parent=0 // pred_fallthru
    _
  // Predicated region
  $region10: #{phi_layer.1} parent=0 // pred_check
    _
  $region11: #{phi_layer.1} parent=0 // pred_check_branch
    %24 = sbr.rel (0) target = $region13
  $region12: #{phi_layer.1} parent=0 // pred_region
    _
  $region13: #{phi_layer.1} parent=0 // pred_fallthru
    _
  // Predicated region
  $region14: #{phi_layer.1} parent=0 // pred_check
    _
  $region15: #{phi_layer.1} parent=0 // pred_check_branch
    %26 = sbr.rel (0) target = $region17
  $region16: #{phi_layer.1} parent=0 // pred_region
    _
  $region17: #{phi_layer.1} parent=0 // pred_fallthru
    _
  // Predicated region
  $region18: #{phi_layer.1} parent=0 // pred_check
    _
  $region19: #{phi_layer.1} parent=0 // pred_check_branch
    %28 = sbr.rel (0) target = $region21
  $region20: #{phi_layer.1} parent=0 // pred_region
    _
  $region21: #{phi_layer.1} parent=0 // pred_fallthru
    _
  // Predicated region
  $region22: #{phi_layer.1} parent=0 // pred_check
    _
  $region23: #{phi_layer.1} parent=0 // pred_check_branch
    %30 = sbr.rel (0) target = $region25
  $region24: #{phi_layer.1} parent=0 // pred_region
    _
  $region25: #{phi_layer.1} parent=0 // pred_fallthru
    _
  // Predicated region
  $region26: #{phi_layer.1} parent=0 // pred_check
    _
  $region27: #{phi_layer.1} parent=0 // pred_check_branch
    %32 = sbr.rel (0) target = $region29
  $region28: #{phi_layer.1} parent=0 // pred_region
    _
  $region29: #{phi_layer.1} parent=0 // pred_fallthru
    _
  // Predicated region
  $region30: #{phi_layer.1} parent=0 // pred_check
    _
  $region31: #{phi_layer.1} parent=0 // pred_check_branch
    %34 = sbr.rel (0) target = $region33
  $region32: #{phi_layer.1} parent=0 // pred_region
    _
  $region33: #{phi_layer.1} parent=0 // pred_fallthru
    _
  // Predicated region
  $region34: #{phi_layer.1} parent=0 // pred_check
    _
  $region35: #{phi_layer.1} parent=0 // pred_check_branch
    %36 = sbr.rel (0) target = $region37
  $region36: #{phi_layer.1} parent=0 // pred_region
    _
  $region37: #{phi_layer.1} parent=0 // pred_fallthru
    _
  // Predicated region
  $region38: #{phi_layer.1} parent=0 // pred_check
    _
  $region39: #{phi_layer.1} parent=0 // pred_check_branch
    %38 = sbr.rel (0) target = $region41
  $region40: #{phi_layer.1} parent=0 // pred_region
    _
  $region41: #{phi_layer.1} parent=0 // pred_fallthru
    _
  // Predicated region
  $region42: #{phi_layer.1} parent=0 // pred_check
    _
  $region43: #{phi_layer.1} parent=0 // pred_check_branch
    %40 = sbr.rel (0) target = $region45
  $region44: #{phi_layer.1} parent=0 // pred_region
    _
  $region45: #{phi_layer.1} parent=0 // pred_fallthru
    _
  // Predicated region
  $region46: #{phi_layer.1} parent=0 // pred_check
    _
  $region47: #{phi_layer.1} parent=0 // pred_check_branch
    %42 = sbr.rel (0) target = $region49
  $region48: #{phi_layer.1} parent=0 // pred_region
    _
  $region49: #{phi_layer.1} parent=0 // pred_fallthru
    _
  // Predicated region
  $region50: #{phi_layer.1} parent=0 // pred_check
    _
  $region51: #{phi_layer.1} parent=0 // pred_check_branch
    %44 = sbr.rel (0) target = $region53
  $region52: #{phi_layer.1} parent=0 // pred_region
    _
  $region53: #{phi_layer.1} parent=0 // pred_fallthru
    _
  // Predicated region
  $region54: #{phi_layer.1} parent=0 // pred_check
    _
  $region55: #{phi_layer.1} parent=0 // pred_check_branch
    %46 = sbr.rel (0) target = $region57
  $region56: #{phi_layer.1} parent=0 // pred_region
    _
  $region57: #{phi_layer.1} parent=0 // pred_fallthru
    _
  %v48 = vld [vmem:[%s0] sm:$0xff]
  %v49 = vld [vmem:[%s0 + $0x8] sm:$0xff]
  %v50 = vld [vmem:[%s0 + $0x10] sm:$0xff]
  %v51 = vld [vmem:[%s0 + $0x18] sm:$0xff]
  %vm52 = vcmask 261120
  %v53 = vsel %vm52, %v48, 0.0
  %54 = vadd.xlane.f32.xlu0 %v53
  %v55 = vpop.xlane.xlu0 %54
  %v56 = vsel %vm52, %v49, 0.0
  %57 = vadd.xlane.f32.xlu0 %v56
  %v58 = vpop.xlane.xlu0 %57
  %v59 = vsel %vm52, %v50, 0.0
  %60 = vadd.xlane.f32.xlu0 %v59
  %v61 = vpop.xlane.xlu0 %60
  %v62 = vsel %vm52, %v51, 0.0
  %63 = vadd.xlane.f32.xlu0 %v62
  %v64 = vpop.xlane.xlu0 %63
  %v65 = vrcp.pop 32.0
  %v66 = vmul.f32 32.0, %v65
  %v67 = vsub.f32 1.0, %v66
  %v68 = vmul.f32 %v65, %v67
  %v69 = vadd.f32 %v65, %v68
  %vm70 = vweird.f32 %v65
  %v71 = vsel %vm70, %v65, %v69
  %v72 = vmul.f32 %v55, %v71
  %v73 = vmul.f32 %v58, %v71
  %v74 = vmul.f32 %v61, %v71
  %v75 = vmul.f32 %v64, %v71
  %v76 = vsub.f32 %v48, %v72
  %v77 = vsub.f32 %v49, %v73
  %v78 = vsub.f32 %v50, %v74
  %v79 = vsub.f32 %v51, %v75
  %v80 = vmul.f32 %v76, %v76
  %v81 = vmul.f32 %v77, %v77
  %v82 = vmul.f32 %v78, %v78
  %v83 = vmul.f32 %v79, %v79
  %v84 = vsel %vm52, %v80, 0.0
  %85 = vadd.xlane.f32.xlu0 %v84
  %v86 = vpop.xlane.xlu0 %85
  %v87 = vsel %vm52, %v81, 0.0
  %88 = vadd.xlane.f32.xlu0 %v87
  %v89 = vpop.xlane.xlu0 %88
  %v90 = vsel %vm52, %v82, 0.0
  %91 = vadd.xlane.f32.xlu0 %v90
  %v92 = vpop.xlane.xlu0 %91
  %v93 = vsel %vm52, %v83, 0.0
  %94 = vadd.xlane.f32.xlu0 %v93
  %v95 = vpop.xlane.xlu0 %94
  %v96 = vmul.f32 %v86, %v71
  %v97 = vmul.f32 %v89, %v71
  %v98 = vmul.f32 %v92, %v71
  %v99 = vmul.f32 %v95, %v71
  %v100 = vadd.f32 %v96, 1e-05
  %v101 = vadd.f32 %v97, 1e-05
  %v102 = vadd.f32 %v98, 1e-05
  %v103 = vadd.f32 %v99, 1e-05
  %v104 = vrsqrt.pop %v100
  %v105 = vmul.f32 %v104, %v100
  %v106 = vmul.f32 %v105, %v104
  %v107 = vmul.f32 0.5, %v106
  %v108 = vsub.f32 1.5, %v107
  %v109 = vmul.f32 %v104, %v108
  %vm110 = vweird.f32 %v100
  %vm111 = vweird.f32 %v104
  %vm112 = vmor %vm110, %vm111
  %v113 = vsel %vm112, %v104, %v109
  %v114 = vrsqrt.pop %v101
  %v115 = vmul.f32 %v114, %v101
  %v116 = vmul.f32 %v115, %v114
  %v117 = vmul.f32 0.5, %v116
  %v118 = vsub.f32 1.5, %v117
  %v119 = vmul.f32 %v114, %v118
  %vm120 = vweird.f32 %v101
  %vm121 = vweird.f32 %v114
  %vm122 = vmor %vm120, %vm121
  %v123 = vsel %vm122, %v114, %v119
  %v124 = vrsqrt.pop %v102
  %v125 = vmul.f32 %v124, %v102
  %v126 = vmul.f32 %v125, %v124
  %v127 = vmul.f32 0.5, %v126
  %v128 = vsub.f32 1.5, %v127
  %v129 = vmul.f32 %v124, %v128
  %vm130 = vweird.f32 %v102
  %vm131 = vweird.f32 %v124
  %vm132 = vmor %vm130, %vm131
  %v133 = vsel %vm132, %v124, %v129
  %v134 = vrsqrt.pop %v103
  %v135 = vmul.f32 %v134, %v103
  %v136 = vmul.f32 %v135, %v134
  %v137 = vmul.f32 0.5, %v136
  %v138 = vsub.f32 1.5, %v137
  %v139 = vmul.f32 %v134, %v138
  %vm140 = vweird.f32 %v103
  %vm141 = vweird.f32 %v134
  %vm142 = vmor %vm140, %vm141
  %v143 = vsel %vm142, %v134, %v139
  %v144 = vmul.f32 %v76, %v113
  %v145 = vmul.f32 %v77, %v123
  %v146 = vmul.f32 %v78, %v133
  %v147 = vmul.f32 %v79, %v143
  %v148 = vld [vmem:[%s4] sm:$0x1]
  %v150 = vperm.slane %v148, 0
  %v152 = vmul.f32 %v144, %v150
  %v153 = vmul.f32 %v145, %v150
  %v154 = vmul.f32 %v146, %v150
  %v155 = vmul.f32 %v147, %v150
  %v156 = vld [vmem:[%s5] sm:$0x1]
  %v158 = vperm.slane %v156, 0
  %v160 = vadd.f32 %v152, %v158
  %v161 = vadd.f32 %v153, %v158
  %v162 = vadd.f32 %v154, %v158
  %v163 = vadd.f32 %v155, %v158
  %v164 = vpack.c.bf16 %v161, %v160
  %v165 = vpack.c.bf16 %v163, %v162
  %v166 = vld [vmem:[%s6] sm:$0xff]
  %v167 = vld [vmem:[%s6 + $0x8] sm:$0xff]
  %v168 = vld [vmem:[%s6 + $0x10] sm:$0xff]
  %v169 = vld [vmem:[%s6 + $0x18] sm:$0xff]
  %v170 = vld [vmem:[%s7] sm:$0x3]
  %v172 = vperm.slane %v170, 0
  %v173 = vperm.slane %v170, 1
  %v180 = vunpack.c.l.b16 %v166
  %v181 = vunpack.c.h.b16 %v166
  %v182 = vunpack.c.l.b16 %v167
  %v183 = vunpack.c.h.b16 %v167
  %v184 = vunpack.c.l.b16 %v168
  %v185 = vunpack.c.h.b16 %v168
  %v186 = vunpack.c.l.b16 %v169
  %v187 = vunpack.c.h.b16 %v169
  %v188 = vpack.c.b16 %v182, %v180
  %v189 = vpack.c.b16 %v183, %v181
  %v190 = vpack.c.b16 %v186, %v184
  %v191 = vpack.c.b16 %v187, %v185
  %v197 = vsel %vm52, %v164, 0
  %v200 = vsel %vm52, %v165, 0
  %202 = vmatpush.bf16.msra.mxu0 0
  %203 = vmatpush.bf16.msra.mxu0 0
  %204 = vmatpush.bf16.msra.mxu0 0
  %205 = vmatpush.bf16.msra.mxu0 0
  %206 = vmatpush.bf16.msra.mxu0 0
  %207 = vmatpush.bf16.msra.mxu0 0
  %208 = vmatpush.bf16.msra.mxu0 %v190
  %209 = vmatpush.bf16.msra.mxu0 %v188
  %210 = vmatmul.bf16.gmra.mxu0 %v197
  %v211 = vpop.f32.mrf.mxu0
  %v212 = vadd.f32 %v172, %v211
  %v213 = vpop.f32.mrf.mxu0
  %v214 = vadd.f32 %v172, %v213
  %215 = vmatmul.bf16.gmra.mxu0 %v200
  %v216 = vpop.f32.mrf.mxu0
  %v217 = vadd.f32 %v172, %v216
  %v218 = vpop.f32.mrf.mxu0
  %v219 = vadd.f32 %v172, %v218
  %220 = vdwg.mxu0
  %221 = vmatpush.bf16.msra.mxu0 0
  %222 = vmatpush.bf16.msra.mxu0 0
  %223 = vmatpush.bf16.msra.mxu0 0
  %224 = vmatpush.bf16.msra.mxu0 0
  %225 = vmatpush.bf16.msra.mxu0 0
  %226 = vmatpush.bf16.msra.mxu0 0
  %227 = vmatpush.bf16.msra.mxu0 %v191
  %228 = vmatpush.bf16.msra.mxu0 %v189
  %229 = vmatmul.bf16.gmra.mxu0 %v197
  %v230 = vpop.f32.mrf.mxu0
  %v231 = vadd.f32 %v173, %v230
  %v232 = vpop.f32.mrf.mxu0
  %v233 = vadd.f32 %v173, %v232
  %234 = vmatmul.bf16.gmra.mxu0 %v200
  %v235 = vpop.f32.mrf.mxu0
  %v236 = vadd.f32 %v173, %v235
  %v237 = vpop.f32.mrf.mxu0
  %v238 = vadd.f32 %v173, %v237
  %239 = vdwg.mxu0
  %v240 = vld [vmem:[%s1] sm:$0xff]
  %v241 = vld [vmem:[%s1 + $0x8] sm:$0xff]
  %v242 = vld [vmem:[%s1 + $0x10] sm:$0xff]
  %v243 = vld [vmem:[%s1 + $0x18] sm:$0xff]
  %v244 = vmul.f32 %v212, %v240
  %v245 = vmul.f32 %v214, %v241
  %v246 = vmul.f32 %v217, %v242
  %v247 = vmul.f32 %v219, %v243
  %v248 = vld [vmem:[%s2] sm:$0xff]
  %v249 = vld [vmem:[%s2 + $0x8] sm:$0xff]
  %v250 = vld [vmem:[%s2 + $0x10] sm:$0xff]
  %v251 = vld [vmem:[%s2 + $0x18] sm:$0xff]
  %256 = vrot.lane.b32.xlu0 %v248, 96
  %v257 = vpop.permute.xlu0 %256
  %258 = vrot.lane.b32.xlu0 %v249, 96
  %v259 = vpop.permute.xlu0 %258
  %260 = vrot.lane.b32.xlu0 %v250, 96
  %v261 = vpop.permute.xlu0 %260
  %262 = vrot.lane.b32.xlu0 %v251, 96
  %v263 = vpop.permute.xlu0 %262
  %v268 = vmul.f32 %v212, %v257
  %v269 = vmul.f32 %v231, %v257
  %v270 = vmul.f32 %v214, %v259
  %v271 = vmul.f32 %v233, %v259
  %v272 = vmul.f32 %v217, %v261
  %v273 = vmul.f32 %v236, %v261
  %v274 = vmul.f32 %v219, %v263
  %v275 = vmul.f32 %v238, %v263
  %284 = vrot.lane.b32.xlu0 %v268, 32
  %v285 = vpop.permute.xlu0 %284
  %286 = vrot.lane.b32.xlu0 %v269, 32
  %v287 = vpop.permute.xlu0 %286
  %288 = vrot.lane.b32.xlu0 %v270, 32
  %v289 = vpop.permute.xlu0 %288
  %290 = vrot.lane.b32.xlu0 %v271, 32
  %v291 = vpop.permute.xlu0 %290
  %292 = vrot.lane.b32.xlu0 %v272, 32
  %v293 = vpop.permute.xlu0 %292
  %294 = vrot.lane.b32.xlu0 %v273, 32
  %v295 = vpop.permute.xlu0 %294
  %296 = vrot.lane.b32.xlu0 %v274, 32
  %v297 = vpop.permute.xlu0 %296
  %298 = vrot.lane.b32.xlu0 %v275, 32
  %v299 = vpop.permute.xlu0 %298
  %v300 = vsel %vm52, %v285, %v287
  %v301 = vsel %vm52, %v289, %v291
  %v302 = vsel %vm52, %v293, %v295
  %v303 = vsel %vm52, %v297, %v299
  %v308 = vadd.f32 %v244, %v300
  %v309 = vadd.f32 %v245, %v301
  %v310 = vadd.f32 %v246, %v302
  %v311 = vadd.f32 %v247, %v303
  %v312 = vpack.c.bf16 %v308, %v308
  %v313 = vpack.c.bf16 %v309, %v309
  %v314 = vpack.c.bf16 %v310, %v310
  %v315 = vpack.c.bf16 %v311, %v311
  %v316 = vld [vmem:[%s3] sm:$0xff]
  %v317 = vld [vmem:[%s3 + $0x8] sm:$0xff]
  %v318 = vld [vmem:[%s3 + $0x10] sm:$0xff]
  %v319 = vld [vmem:[%s3 + $0x18] sm:$0xff]
  %v324 = vunpack.c.l.b16 %v312
  %v325 = vunpack.c.l.b16 %v313
  %v326 = vunpack.c.l.b16 %v314
  %v327 = vunpack.c.l.b16 %v315
  %v328 = vpack.c.b16 %v325, %v324
  %v329 = vpack.c.b16 %v327, %v326
  %330 = vrot.lane.b32.xlu0 %v328, 96
  %v331 = vpop.permute.xlu0 %330
  %332 = vrot.lane.b32.xlu0 %v329, 96
  %v333 = vpop.permute.xlu0 %332
  %vm334 = vcmask 64512
  %v336 = vsel %vm334, %v328, 0
  %v339 = vsel %vm334, %v329, 0
  %v342 = vsel %vm334, %v331, 0
  %v345 = vsel %vm334, %v333, 0
  %347 = vmatpush.bf16.xpose.msra.mxu0 0
  %348 = vmatpush.bf16.xpose.msra.mxu0 0
  %349 = vmatpush.bf16.xpose.msra.mxu0 0
  %350 = vmatpush.bf16.xpose.msra.mxu0 0
  %351 = vmatpush.bf16.xpose.msra.mxu0 0
  %352 = vmatpush.bf16.xpose.msra.mxu0 0
  %353 = vmatpush.bf16.xpose.msra.mxu0 %v345
  %354 = vmatpush.bf16.xpose.msra.mxu0 %v342
  %355 = vmatmul.bf16.gmra.mxu0 %v336
  %v356 = vpop.f32.mrf.mxu0
  %v357 = vadd.f32 %v316, %v356
  %v358 = vpop.f32.mrf.mxu0
  %v359 = vadd.f32 %v317, %v358
  %360 = vmatmul.bf16.gmra.mxu0 %v339
  %v361 = vpop.f32.mrf.mxu0
  %v362 = vadd.f32 %v318, %v361
  %v363 = vpop.f32.mrf.mxu0
  %v364 = vadd.f32 %v319, %v363
  %365 = vdwg.mxu0
  %v366 = vsel %vm52, %v357, -inf
  %367 = vmax.xlane.f32.xlu0 %v366
  %v368 = vpop.xlane.xlu0 %367
  %v369 = vsel %vm52, %v359, -inf
  %370 = vmax.xlane.f32.xlu0 %v369
  %v371 = vpop.xlane.xlu0 %370
  %v372 = vsel %vm52, %v362, -inf
  %373 = vmax.xlane.f32.xlu0 %v372
  %v374 = vpop.xlane.xlu0 %373
  %v375 = vsel %vm52, %v364, -inf
  %376 = vmax.xlane.f32.xlu0 %v375
  %v377 = vpop.xlane.xlu0 %376
  %v378 = vsub.f32 %v357, %v368
  %v379 = vsub.f32 %v359, %v371
  %v380 = vsub.f32 %v362, %v374
  %v381 = vsub.f32 %v364, %v377
  %v382 = vmul.f32 %v378, 1.442695
  %v383 = vpow.pop %v382
  %v384 = vmul.f32 %v379, 1.442695
  %v385 = vpow.pop %v384
  %v386 = vmul.f32 %v380, 1.442695
  %v387 = vpow.pop %v386
  %v388 = vmul.f32 %v381, 1.442695
  %v389 = vpow.pop %v388
  %v390 = vsel %vm52, %v383, 0.0
  %391 = vadd.xlane.f32.xlu0 %v390
  %v392 = vpop.xlane.xlu0 %391
  %v393 = vsel %vm52, %v385, 0.0
  %394 = vadd.xlane.f32.xlu0 %v393
  %v395 = vpop.xlane.xlu0 %394
  %v396 = vsel %vm52, %v387, 0.0
  %397 = vadd.xlane.f32.xlu0 %v396
  %v398 = vpop.xlane.xlu0 %397
  %v399 = vsel %vm52, %v389, 0.0
  %400 = vadd.xlane.f32.xlu0 %v399
  %v401 = vpop.xlane.xlu0 %400
  %v402 = vrcp.pop %v392
  %v403 = vrcp.pop %v395
  %v404 = vrcp.pop %v398
  %v405 = vrcp.pop %v401
  %v406 = vmul.f32 %v383, %v402
  %v407 = vmul.f32 %v385, %v403
  %v408 = vmul.f32 %v387, %v404
  %v409 = vmul.f32 %v389, %v405
  %v410 = vpack.c.bf16 %v407, %v406
  %v411 = vpack.c.bf16 %v409, %v408
  %412 = vrot.lane.b32.xlu0 %v328, 64
  %v413 = vpop.permute.xlu0 %412
  %414 = vrot.lane.b32.xlu0 %v329, 64
  %v415 = vpop.permute.xlu0 %414
  %v419 = vsel %vm52, %v410, 0
  %v422 = vsel %vm52, %v411, 0
  %424 = vmatpush.bf16.msra.mxu0 0
  %425 = vmatpush.bf16.msra.mxu0 0
  %426 = vmatpush.bf16.msra.mxu0 0
  %427 = vmatpush.bf16.msra.mxu0 0
  %428 = vmatpush.bf16.msra.mxu0 0
  %429 = vmatpush.bf16.msra.mxu0 0
  %430 = vmatpush.bf16.msra.mxu0 %v415
  %431 = vmatpush.bf16.msra.mxu0 %v413
  %432 = vmatmul.bf16.gmra.mxu0 %v419
  %v433 = vpop.f32.mrf.mxu0
  %v434 = vadd.f32 0.0, %v433
  %v435 = vpop.f32.mrf.mxu0
  %v436 = vadd.f32 0.0, %v435
  %437 = vmatmul.bf16.gmra.mxu0 %v422
  %v438 = vpop.f32.mrf.mxu0
  %v439 = vadd.f32 0.0, %v438
  %v440 = vpop.f32.mrf.mxu0
  %v441 = vadd.f32 0.0, %v440
  %442 = vdwg.mxu0
  %443 = vrot.lane.b32.xlu0 %v328, 120
  %v444 = vpop.permute.xlu0 %443
  %445 = vrot.lane.b32.xlu0 %v329, 120
  %v446 = vpop.permute.xlu0 %445
  %447 = vrot.lane.b32.xlu0 %v328, 88
  %v448 = vpop.permute.xlu0 %447
  %449 = vrot.lane.b32.xlu0 %v329, 88
  %v450 = vpop.permute.xlu0 %449
  %v452 = vsel %vm334, %v444, 0
  %v455 = vsel %vm334, %v446, 0
  %v458 = vsel %vm334, %v448, 0
  %v461 = vsel %vm334, %v450, 0
  %463 = vmatpush.bf16.xpose.msra.mxu0 0
  %464 = vmatpush.bf16.xpose.msra.mxu0 0
  %465 = vmatpush.bf16.xpose.msra.mxu0 0
  %466 = vmatpush.bf16.xpose.msra.mxu0 0
  %467 = vmatpush.bf16.xpose.msra.mxu0 0
  %468 = vmatpush.bf16.xpose.msra.mxu0 0
  %469 = vmatpush.bf16.xpose.msra.mxu0 %v461
  %470 = vmatpush.bf16.xpose.msra.mxu0 %v458
  %471 = vmatmul.bf16.gmra.mxu0 %v452
  %v472 = vpop.f32.mrf.mxu0
  %v473 = vadd.f32 %v316, %v472
  %v474 = vpop.f32.mrf.mxu0
  %v475 = vadd.f32 %v317, %v474
  %476 = vmatmul.bf16.gmra.mxu0 %v455
  %v477 = vpop.f32.mrf.mxu0
  %v478 = vadd.f32 %v318, %v477
  %v479 = vpop.f32.mrf.mxu0
  %v480 = vadd.f32 %v319, %v479
  %481 = vdwg.mxu0
  %v482 = vsel %vm52, %v473, -inf
  %483 = vmax.xlane.f32.xlu0 %v482
  %v484 = vpop.xlane.xlu0 %483
  %v485 = vsel %vm52, %v475, -inf
  %486 = vmax.xlane.f32.xlu0 %v485
  %v487 = vpop.xlane.xlu0 %486
  %v488 = vsel %vm52, %v478, -inf
  %489 = vmax.xlane.f32.xlu0 %v488
  %v490 = vpop.xlane.xlu0 %489
  %v491 = vsel %vm52, %v480, -inf
  %492 = vmax.xlane.f32.xlu0 %v491
  %v493 = vpop.xlane.xlu0 %492
  %v494 = vsub.f32 %v473, %v484
  %v495 = vsub.f32 %v475, %v487
  %v496 = vsub.f32 %v478, %v490
  %v497 = vsub.f32 %v480, %v493
  %v498 = vmul.f32 %v494, 1.442695
  %v499 = vpow.pop %v498
  %v500 = vmul.f32 %v495, 1.442695
  %v501 = vpow.pop %v500
  %v502 = vmul.f32 %v496, 1.442695
  %v503 = vpow.pop %v502
  %v504 = vmul.f32 %v497, 1.442695
  %v505 = vpow.pop %v504
  %v506 = vsel %vm52, %v499, 0.0
  %507 = vadd.xlane.f32.xlu0 %v506
  %v508 = vpop.xlane.xlu0 %507
  %v509 = vsel %vm52, %v501, 0.0
  %510 = vadd.xlane.f32.xlu0 %v509
  %v511 = vpop.xlane.xlu0 %510
  %v512 = vsel %vm52, %v503, 0.0
  %513 = vadd.xlane.f32.xlu0 %v512
  %v514 = vpop.xlane.xlu0 %513
  %v515 = vsel %vm52, %v505, 0.0
  %516 = vadd.xlane.f32.xlu0 %v515
  %v517 = vpop.xlane.xlu0 %516
  %v518 = vrcp.pop %v508
  %v519 = vrcp.pop %v511
  %v520 = vrcp.pop %v514
  %v521 = vrcp.pop %v517
  %v522 = vmul.f32 %v499, %v518
  %v523 = vmul.f32 %v501, %v519
  %v524 = vmul.f32 %v503, %v520
  %v525 = vmul.f32 %v505, %v521
  %v526 = vpack.c.bf16 %v523, %v522
  %v527 = vpack.c.bf16 %v525, %v524
  %528 = vrot.lane.b32.xlu0 %v328, 56
  %v529 = vpop.permute.xlu0 %528
  %530 = vrot.lane.b32.xlu0 %v329, 56
  %v531 = vpop.permute.xlu0 %530
  %v535 = vsel %vm52, %v526, 0
  %v538 = vsel %vm52, %v527, 0
  %540 = vmatpush.bf16.msra.mxu0 0
  %541 = vmatpush.bf16.msra.mxu0 0
  %542 = vmatpush.bf16.msra.mxu0 0
  %543 = vmatpush.bf16.msra.mxu0 0
  %544 = vmatpush.bf16.msra.mxu0 0
  %545 = vmatpush.bf16.msra.mxu0 0
  %546 = vmatpush.bf16.msra.mxu0 %v531
  %547 = vmatpush.bf16.msra.mxu0 %v529
  %548 = vmatmul.bf16.gmra.mxu0 %v535
  %v549 = vpop.f32.mrf.mxu0
  %v550 = vadd.f32 0.0, %v549
  %v551 = vpop.f32.mrf.mxu0
  %v552 = vadd.f32 0.0, %v551
  %553 = vmatmul.bf16.gmra.mxu0 %v538
  %v554 = vpop.f32.mrf.mxu0
  %v555 = vadd.f32 0.0, %v554
  %v556 = vpop.f32.mrf.mxu0
  %v557 = vadd.f32 0.0, %v556
  %558 = vdwg.mxu0
  %559 = vrot.lane.b32.xlu0 %v328, 112
  %v560 = vpop.permute.xlu0 %559
  %561 = vrot.lane.b32.xlu0 %v329, 112
  %v562 = vpop.permute.xlu0 %561
  %563 = vrot.lane.b32.xlu0 %v328, 80
  %v564 = vpop.permute.xlu0 %563
  %565 = vrot.lane.b32.xlu0 %v329, 80
  %v566 = vpop.permute.xlu0 %565
  %v568 = vsel %vm334, %v560, 0
  %v571 = vsel %vm334, %v562, 0
  %v574 = vsel %vm334, %v564, 0
  %v577 = vsel %vm334, %v566, 0
  %579 = vmatpush.bf16.xpose.msra.mxu0 0
  %580 = vmatpush.bf16.xpose.msra.mxu0 0
  %581 = vmatpush.bf16.xpose.msra.mxu0 0
  %582 = vmatpush.bf16.xpose.msra.mxu0 0
  %583 = vmatpush.bf16.xpose.msra.mxu0 0
  %584 = vmatpush.bf16.xpose.msra.mxu0 0
  %585 = vmatpush.bf16.xpose.msra.mxu0 %v577
  %586 = vmatpush.bf16.xpose.msra.mxu0 %v574
  %587 = vmatmul.bf16.gmra.mxu0 %v568
  %v588 = vpop.f32.mrf.mxu0
  %v589 = vadd.f32 %v316, %v588
  %v590 = vpop.f32.mrf.mxu0
  %v591 = vadd.f32 %v317, %v590
  %592 = vmatmul.bf16.gmra.mxu0 %v571
  %v593 = vpop.f32.mrf.mxu0
  %v594 = vadd.f32 %v318, %v593
  %v595 = vpop.f32.mrf.mxu0
  %v596 = vadd.f32 %v319, %v595
  %597 = vdwg.mxu0
  %v598 = vsel %vm52, %v589, -inf
  %599 = vmax.xlane.f32.xlu0 %v598
  %v600 = vpop.xlane.xlu0 %599
  %v601 = vsel %vm52, %v591, -inf
  %602 = vmax.xlane.f32.xlu0 %v601
  %v603 = vpop.xlane.xlu0 %602
  %v604 = vsel %vm52, %v594, -inf
  %605 = vmax.xlane.f32.xlu0 %v604
  %v606 = vpop.xlane.xlu0 %605
  %v607 = vsel %vm52, %v596, -inf
  %608 = vmax.xlane.f32.xlu0 %v607
  %v609 = vpop.xlane.xlu0 %608
  %v610 = vsub.f32 %v589, %v600
  %v611 = vsub.f32 %v591, %v603
  %v612 = vsub.f32 %v594, %v606
  %v613 = vsub.f32 %v596, %v609
  %v614 = vmul.f32 %v610, 1.442695
  %v615 = vpow.pop %v614
  %v616 = vmul.f32 %v611, 1.442695
  %v617 = vpow.pop %v616
  %v618 = vmul.f32 %v612, 1.442695
  %v619 = vpow.pop %v618
  %v620 = vmul.f32 %v613, 1.442695
  %v621 = vpow.pop %v620
  %v622 = vsel %vm52, %v615, 0.0
  %623 = vadd.xlane.f32.xlu0 %v622
  %v624 = vpop.xlane.xlu0 %623
  %v625 = vsel %vm52, %v617, 0.0
  %626 = vadd.xlane.f32.xlu0 %v625
  %v627 = vpop.xlane.xlu0 %626
  %v628 = vsel %vm52, %v619, 0.0
  %629 = vadd.xlane.f32.xlu0 %v628
  %v630 = vpop.xlane.xlu0 %629
  %v631 = vsel %vm52, %v621, 0.0
  %632 = vadd.xlane.f32.xlu0 %v631
  %v633 = vpop.xlane.xlu0 %632
  %v634 = vrcp.pop %v624
  %v635 = vrcp.pop %v627
  %v636 = vrcp.pop %v630
  %v637 = vrcp.pop %v633
  %v638 = vmul.f32 %v615, %v634
  %v639 = vmul.f32 %v617, %v635
  %v640 = vmul.f32 %v619, %v636
  %v641 = vmul.f32 %v621, %v637
  %v642 = vpack.c.bf16 %v639, %v638
  %v643 = vpack.c.bf16 %v641, %v640
  %644 = vrot.lane.b32.xlu0 %v328, 48
  %v645 = vpop.permute.xlu0 %644
  %646 = vrot.lane.b32.xlu0 %v329, 48
  %v647 = vpop.permute.xlu0 %646
  %v651 = vsel %vm52, %v642, 0
  %v654 = vsel %vm52, %v643, 0
  %656 = vmatpush.bf16.msra.mxu0 0
  %657 = vmatpush.bf16.msra.mxu0 0
  %658 = vmatpush.bf16.msra.mxu0 0
  %659 = vmatpush.bf16.msra.mxu0 0
  %660 = vmatpush.bf16.msra.mxu0 0
  %661 = vmatpush.bf16.msra.mxu0 0
  %662 = vmatpush.bf16.msra.mxu0 %v647
  %663 = vmatpush.bf16.msra.mxu0 %v645
  %664 = vmatmul.bf16.gmra.mxu0 %v651
  %v665 = vpop.f32.mrf.mxu0
  %v666 = vadd.f32 0.0, %v665
  %v667 = vpop.f32.mrf.mxu0
  %v668 = vadd.f32 0.0, %v667
  %669 = vmatmul.bf16.gmra.mxu0 %v654
  %v670 = vpop.f32.mrf.mxu0
  %v671 = vadd.f32 0.0, %v670
  %v672 = vpop.f32.mrf.mxu0
  %v673 = vadd.f32 0.0, %v672
  %674 = vdwg.mxu0
  %675 = vrot.lane.b32.xlu0 %v328, 104
  %v676 = vpop.permute.xlu0 %675
  %677 = vrot.lane.b32.xlu0 %v329, 104
  %v678 = vpop.permute.xlu0 %677
  %679 = vrot.lane.b32.xlu0 %v328, 72
  %v680 = vpop.permute.xlu0 %679
  %681 = vrot.lane.b32.xlu0 %v329, 72
  %v682 = vpop.permute.xlu0 %681
  %v684 = vsel %vm334, %v676, 0
  %v687 = vsel %vm334, %v678, 0
  %v690 = vsel %vm334, %v680, 0
  %v693 = vsel %vm334, %v682, 0
  %695 = vmatpush.bf16.xpose.msra.mxu0 0
  %696 = vmatpush.bf16.xpose.msra.mxu0 0
  %697 = vmatpush.bf16.xpose.msra.mxu0 0
  %698 = vmatpush.bf16.xpose.msra.mxu0 0
  %699 = vmatpush.bf16.xpose.msra.mxu0 0
  %700 = vmatpush.bf16.xpose.msra.mxu0 0
  %701 = vmatpush.bf16.xpose.msra.mxu0 %v693
  %702 = vmatpush.bf16.xpose.msra.mxu0 %v690
  %703 = vmatmul.bf16.gmra.mxu0 %v684
  %v704 = vpop.f32.mrf.mxu0
  %v705 = vadd.f32 %v316, %v704
  %v706 = vpop.f32.mrf.mxu0
  %v707 = vadd.f32 %v317, %v706
  %708 = vmatmul.bf16.gmra.mxu0 %v687
  %v709 = vpop.f32.mrf.mxu0
  %v710 = vadd.f32 %v318, %v709
  %v711 = vpop.f32.mrf.mxu0
  %v712 = vadd.f32 %v319, %v711
  %713 = vdwg.mxu0
  %v714 = vsel %vm52, %v705, -inf
  %715 = vmax.xlane.f32.xlu0 %v714
  %v716 = vpop.xlane.xlu0 %715
  %v717 = vsel %vm52, %v707, -inf
  %718 = vmax.xlane.f32.xlu0 %v717
  %v719 = vpop.xlane.xlu0 %718
  %v720 = vsel %vm52, %v710, -inf
  %721 = vmax.xlane.f32.xlu0 %v720
  %v722 = vpop.xlane.xlu0 %721
  %v723 = vsel %vm52, %v712, -inf
  %724 = vmax.xlane.f32.xlu0 %v723
  %v725 = vpop.xlane.xlu0 %724
  %v726 = vsub.f32 %v705, %v716
  %v727 = vsub.f32 %v707, %v719
  %v728 = vsub.f32 %v710, %v722
  %v729 = vsub.f32 %v712, %v725
  %v730 = vmul.f32 %v726, 1.442695
  %v731 = vpow.pop %v730
  %v732 = vmul.f32 %v727, 1.442695
  %v733 = vpow.pop %v732
  %v734 = vmul.f32 %v728, 1.442695
  %v735 = vpow.pop %v734
  %v736 = vmul.f32 %v729, 1.442695
  %v737 = vpow.pop %v736
  %v738 = vsel %vm52, %v731, 0.0
  %739 = vadd.xlane.f32.xlu0 %v738
  %v740 = vpop.xlane.xlu0 %739
  %v741 = vsel %vm52, %v733, 0.0
  %742 = vadd.xlane.f32.xlu0 %v741
  %v743 = vpop.xlane.xlu0 %742
  %v744 = vsel %vm52, %v735, 0.0
  %745 = vadd.xlane.f32.xlu0 %v744
  %v746 = vpop.xlane.xlu0 %745
  %v747 = vsel %vm52, %v737, 0.0
  %748 = vadd.xlane.f32.xlu0 %v747
  %v749 = vpop.xlane.xlu0 %748
  %v750 = vrcp.pop %v740
  %v751 = vrcp.pop %v743
  %v752 = vrcp.pop %v746
  %v753 = vrcp.pop %v749
  %v754 = vmul.f32 %v731, %v750
  %v755 = vmul.f32 %v733, %v751
  %v756 = vmul.f32 %v735, %v752
  %v757 = vmul.f32 %v737, %v753
  %v758 = vpack.c.bf16 %v755, %v754
  %v759 = vpack.c.bf16 %v757, %v756
  %760 = vrot.lane.b32.xlu0 %v328, 40
  %v761 = vpop.permute.xlu0 %760
  %762 = vrot.lane.b32.xlu0 %v329, 40
  %v763 = vpop.permute.xlu0 %762
  %v767 = vsel %vm52, %v758, 0
  %v770 = vsel %vm52, %v759, 0
  %772 = vmatpush.bf16.msra.mxu0 0
  %773 = vmatpush.bf16.msra.mxu0 0
  %774 = vmatpush.bf16.msra.mxu0 0
  %775 = vmatpush.bf16.msra.mxu0 0
  %776 = vmatpush.bf16.msra.mxu0 0
  %777 = vmatpush.bf16.msra.mxu0 0
  %778 = vmatpush.bf16.msra.mxu0 %v763
  %779 = vmatpush.bf16.msra.mxu0 %v761
  %780 = vmatmul.bf16.gmra.mxu0 %v767
  %v781 = vpop.f32.mrf.mxu0
  %v782 = vadd.f32 0.0, %v781
  %v783 = vpop.f32.mrf.mxu0
  %v784 = vadd.f32 0.0, %v783
  %785 = vmatmul.bf16.gmra.mxu0 %v770
  %v786 = vpop.f32.mrf.mxu0
  %v787 = vadd.f32 0.0, %v786
  %v788 = vpop.f32.mrf.mxu0
  %v789 = vadd.f32 0.0, %v788
  %790 = vdwg.mxu0
  %795 = vrot.lane.b32.xlu0 %v550, 8
  %v796 = vpop.permute.xlu0 %795
  %797 = vrot.lane.b32.xlu0 %v552, 8
  %v798 = vpop.permute.xlu0 %797
  %799 = vrot.lane.b32.xlu0 %v555, 8
  %v800 = vpop.permute.xlu0 %799
  %801 = vrot.lane.b32.xlu0 %v557, 8
  %v802 = vpop.permute.xlu0 %801
  %811 = vrot.lane.b32.xlu0 %v666, 16
  %v812 = vpop.permute.xlu0 %811
  %813 = vrot.lane.b32.xlu0 %v668, 16
  %v814 = vpop.permute.xlu0 %813
  %815 = vrot.lane.b32.xlu0 %v671, 16
  %v816 = vpop.permute.xlu0 %815
  %817 = vrot.lane.b32.xlu0 %v673, 16
  %v818 = vpop.permute.xlu0 %817
  %827 = vrot.lane.b32.xlu0 %v782, 24
  %v828 = vpop.permute.xlu0 %827
  %829 = vrot.lane.b32.xlu0 %v784, 24
  %v830 = vpop.permute.xlu0 %829
  %831 = vrot.lane.b32.xlu0 %v787, 24
  %v832 = vpop.permute.xlu0 %831
  %833 = vrot.lane.b32.xlu0 %v789, 24
  %v834 = vpop.permute.xlu0 %833
  %v839 = vsel %vm334, %v434, %v796
  %v840 = vsel %vm334, %v436, %v798
  %v841 = vsel %vm334, %v439, %v800
  %v842 = vsel %vm334, %v441, %v802
  %vm843 = vcmask 130048
  %v844 = vsel %vm843, %v839, %v812
  %v845 = vsel %vm843, %v840, %v814
  %v846 = vsel %vm843, %v841, %v816
  %v847 = vsel %vm843, %v842, %v818
  %vm848 = vcmask 195584
  %v849 = vsel %vm848, %v844, %v828
  %v850 = vsel %vm848, %v845, %v830
  %v851 = vsel %vm848, %v846, %v832
  %v852 = vsel %vm848, %v847, %v834
  %v853 = vpack.c.bf16 %v850, %v849
  %v854 = vpack.c.bf16 %v852, %v851
  %v855 = vld [vmem:[%s8] sm:$0xf]
  %v856 = vld [vmem:[%s8 + $0x4] sm:$0xf]
  %v857 = vld [vmem:[%s8 + $0x8] sm:$0xf]
  %v858 = vld [vmem:[%s8 + $0xc] sm:$0xf]
  %v859 = vld [vmem:[%s9] sm:$0x1]
  %v861 = vperm.slane %v859, 0
  %v867 = vunpack.c.l.b16 %v855
  %v868 = vunpack.c.l.b16 %v856
  %v869 = vunpack.c.l.b16 %v857
  %v870 = vunpack.c.l.b16 %v858
  %v871 = vpack.c.b16 %v868, %v867
  %v872 = vpack.c.b16 %v870, %v869
  %v876 = vsel %vm52, %v853, 0
  %v879 = vsel %vm52, %v854, 0
  %881 = vmatpush.bf16.msra.mxu0 0
  %882 = vmatpush.bf16.msra.mxu0 0
  %883 = vmatpush.bf16.msra.mxu0 0
  %884 = vmatpush.bf16.msra.mxu0 0
  %885 = vmatpush.bf16.msra.mxu0 0
  %886 = vmatpush.bf16.msra.mxu0 0
  %887 = vmatpush.bf16.msra.mxu0 %v872
  %888 = vmatpush.bf16.msra.mxu0 %v871
  %889 = vmatmul.bf16.gmra.mxu0 %v876
  %v890 = vpop.f32.mrf.mxu0
  %v891 = vadd.f32 %v861, %v890
  %v892 = vpop.f32.mrf.mxu0
  %v893 = vadd.f32 %v861, %v892
  %894 = vmatmul.bf16.gmra.mxu0 %v879
  %v895 = vpop.f32.mrf.mxu0
  %v896 = vadd.f32 %v861, %v895
  %v897 = vpop.f32.mrf.mxu0
  %v898 = vadd.f32 %v861, %v897
  %899 = vdwg.mxu0
  %v900 = vld [vmem:[%s10] sm:$0xf]
  %v901 = vld [vmem:[%s10 + $0x4] sm:$0xf]
  %v902 = vld [vmem:[%s10 + $0x8] sm:$0xf]
  %v903 = vld [vmem:[%s10 + $0xc] sm:$0xf]
  %v904 = vld [vmem:[%s11] sm:$0x1]
  %v906 = vperm.slane %v904, 0
  %v912 = vunpack.c.l.b16 %v900
  %v913 = vunpack.c.l.b16 %v901
  %v914 = vunpack.c.l.b16 %v902
  %v915 = vunpack.c.l.b16 %v903
  %v916 = vpack.c.b16 %v913, %v912
  %v917 = vpack.c.b16 %v915, %v914
  %920 = vmatpush.bf16.msra.mxu0 0
  %921 = vmatpush.bf16.msra.mxu0 0
  %922 = vmatpush.bf16.msra.mxu0 0
  %923 = vmatpush.bf16.msra.mxu0 0
  %924 = vmatpush.bf16.msra.mxu0 0
  %925 = vmatpush.bf16.msra.mxu0 0
  %926 = vmatpush.bf16.msra.mxu0 %v917
  %927 = vmatpush.bf16.msra.mxu0 %v916
  %928 = vmatmul.bf16.gmra.mxu0 %v197
  %v929 = vpop.f32.mrf.mxu0
  %v930 = vadd.f32 %v906, %v929
  %v931 = vpop.f32.mrf.mxu0
  %v932 = vadd.f32 %v906, %v931
  %933 = vmatmul.bf16.gmra.mxu0 %v200
  %v934 = vpop.f32.mrf.mxu0
  %v935 = vadd.f32 %v906, %v934
  %v936 = vpop.f32.mrf.mxu0
  %v937 = vadd.f32 %v906, %v936
  %938 = vdwg.mxu0
  %v939 = vmul.f32 %v930, 0.5
  %v940 = vmul.f32 %v932, 0.5
  %v941 = vmul.f32 %v935, 0.5
  %v942 = vmul.f32 %v937, 0.5
  %v943 = vmul.f32 %v930, 0.044715
  %v944 = vmul.f32 %v932, 0.044715
  %v945 = vmul.f32 %v935, 0.044715
  %v946 = vmul.f32 %v937, 0.044715
  %v947 = vmul.f32 %v943, %v930
  %v948 = vmul.f32 %v944, %v932
  %v949 = vmul.f32 %v945, %v935
  %v950 = vmul.f32 %v946, %v937
  %v951 = vmul.f32 %v947, %v930
  %v952 = vmul.f32 %v948, %v932
  %v953 = vmul.f32 %v949, %v935
  %v954 = vmul.f32 %v950, %v937
  %v955 = vadd.f32 %v930, %v951
  %v956 = vadd.f32 %v932, %v952
  %v957 = vadd.f32 %v935, %v953
  %v958 = vadd.f32 %v937, %v954
  %v959 = vmul.f32 %v955, 0.7978846
  %v960 = vmul.f32 %v956, 0.7978846
  %v961 = vmul.f32 %v957, 0.7978846
  %v962 = vmul.f32 %v958, 0.7978846
  %v963 = vtanh.pop %v959
  %v964 = vtanh.pop %v960
  %v965 = vtanh.pop %v961
  %v966 = vtanh.pop %v962
  %v967 = vadd.f32 %v963, 1.0
  %v968 = vadd.f32 %v964, 1.0
  %v969 = vadd.f32 %v965, 1.0
  %v970 = vadd.f32 %v966, 1.0
  %v971 = vmul.f32 %v939, %v967
  %v972 = vmul.f32 %v940, %v968
  %v973 = vmul.f32 %v941, %v969
  %v974 = vmul.f32 %v942, %v970
  %v975 = vpack.c.bf16 %v972, %v971
  %v976 = vpack.c.bf16 %v974, %v973
  %v977 = vld [vmem:[%s12] sm:$0xf]
  %v978 = vld [vmem:[%s12 + $0x4] sm:$0xf]
  %v979 = vld [vmem:[%s12 + $0x8] sm:$0xf]
  %v980 = vld [vmem:[%s12 + $0xc] sm:$0xf]
  %v981 = vld [vmem:[%s12 + $0x10] sm:$0xf]
  %v982 = vld [vmem:[%s12 + $0x14] sm:$0xf]
  %v983 = vld [vmem:[%s12 + $0x18] sm:$0xf]
  %v984 = vld [vmem:[%s12 + $0x1c] sm:$0xf]
  %v985 = vld [vmem:[%s12 + $0x20] sm:$0xf]
  %v986 = vld [vmem:[%s12 + $0x24] sm:$0xf]
  %v987 = vld [vmem:[%s12 + $0x28] sm:$0xf]
  %v988 = vld [vmem:[%s12 + $0x2c] sm:$0xf]
  %v989 = vld [vmem:[%s12 + $0x30] sm:$0xf]
  %v990 = vld [vmem:[%s12 + $0x34] sm:$0xf]
  %v991 = vld [vmem:[%s12 + $0x38] sm:$0xf]
  %v992 = vld [vmem:[%s12 + $0x3c] sm:$0xf]
  %v993 = vld [vmem:[%s13] sm:$0x1]
  %v995 = vperm.slane %v993, 0
  %v1013 = vunpack.c.l.b16 %v977
  %v1014 = vunpack.c.l.b16 %v978
  %v1015 = vunpack.c.l.b16 %v979
  %v1016 = vunpack.c.l.b16 %v980
  %v1017 = vunpack.c.l.b16 %v981
  %v1018 = vunpack.c.l.b16 %v982
  %v1019 = vunpack.c.l.b16 %v983
  %v1020 = vunpack.c.l.b16 %v984
  %v1021 = vunpack.c.l.b16 %v985
  %v1022 = vunpack.c.l.b16 %v986
  %v1023 = vunpack.c.l.b16 %v987
  %v1024 = vunpack.c.l.b16 %v988
  %v1025 = vunpack.c.l.b16 %v989
  %v1026 = vunpack.c.l.b16 %v990
  %v1027 = vunpack.c.l.b16 %v991
  %v1028 = vunpack.c.l.b16 %v992
  %v1029 = vpack.c.b16 %v1014, %v1013
  %v1030 = vpack.c.b16 %v1016, %v1015
  %v1031 = vpack.c.b16 %v1018, %v1017
  %v1032 = vpack.c.b16 %v1020, %v1019
  %v1033 = vpack.c.b16 %v1022, %v1021
  %v1034 = vpack.c.b16 %v1024, %v1023
  %v1035 = vpack.c.b16 %v1026, %v1025
  %v1036 = vpack.c.b16 %v1028, %v1027
  %1045 = vmatpush.bf16.msra.mxu0 %v1036
  %1046 = vmatpush.bf16.msra.mxu0 %v1035
  %1047 = vmatpush.bf16.msra.mxu0 %v1034
  %1048 = vmatpush.bf16.msra.mxu0 %v1033
  %1049 = vmatpush.bf16.msra.mxu0 %v1032
  %1050 = vmatpush.bf16.msra.mxu0 %v1031
  %1051 = vmatpush.bf16.msra.mxu0 %v1030
  %1052 = vmatpush.bf16.msra.mxu0 %v1029
  %1053 = vmatmul.bf16.gmra.mxu0 %v975
  %v1054 = vpop.f32.mrf.mxu0
  %v1055 = vadd.f32 %v995, %v1054
  %v1056 = vpop.f32.mrf.mxu0
  %v1057 = vadd.f32 %v995, %v1056
  %1058 = vmatmul.bf16.gmra.mxu0 %v976
  %v1059 = vpop.f32.mrf.mxu0
  %v1060 = vadd.f32 %v995, %v1059
  %v1061 = vpop.f32.mrf.mxu0
  %v1062 = vadd.f32 %v995, %v1061
  %1063 = vdwg.mxu0
  %v1064 = vadd.f32 %v891, %v1055
  %v1065 = vadd.f32 %v893, %v1057
  %v1066 = vadd.f32 %v896, %v1060
  %v1067 = vadd.f32 %v898, %v1062
  %v1068 = vadd.f32 %v1064, %v48
  %v1069 = vadd.f32 %v1065, %v49
  %v1070 = vadd.f32 %v1066, %v50
  %v1071 = vadd.f32 %v1067, %v51
  %1073 = vrot.lane.b32.xlu0 %v1069, 32
  %v1074 = vpop.permute.xlu0 %1073
  %1077 = vrot.lane.b32.xlu0 %v1070, 64
  %v1078 = vpop.permute.xlu0 %1077
  %1081 = vrot.lane.b32.xlu0 %v1071, 96
  %v1082 = vpop.permute.xlu0 %1081
  %v1084 = vsel %vm52, %v1068, %v1074
  %vm1085 = vcmask 523264
  %v1086 = vsel %vm1085, %v1084, %v1078
  %vm1087 = vcmask 785408
  %v1088 = vsel %vm1087, %v1086, %v1082
  %1089 = vst [vmem:[%s14] sm:$0xff] %v1088
  // Predicated region
  $region58: #{phi_layer.1} parent=0 // pred_check
    _
  $region59: #{phi_layer.1} parent=0 // pred_check_branch
    %1091 = sbr.rel (0) target = $region61
  $region60: #{phi_layer.1} parent=0 // pred_region
    _
  $region61: #{phi_layer.1} parent=0 // pred_fallthru
    _
  // Predicated region
  $region62: #{phi_layer.1} parent=0 // pred_check
    _
  $region63: #{phi_layer.1} parent=0 // pred_check_branch
    %1093 = sbr.rel (0) target = $region65
  $region64: #{phi_layer.1} parent=0 // pred_region
    _
  $region65: #{phi_layer.1} parent=0 // pred_fallthru
    _

</llo_original>
